<compile_context>
chip_gen: v6e
topology: v6e:2x2x1
jax: 0.10.0
libtpu: 0.0.40
codegen_flags: <defaults>
</compile_context>

<pallas_src>
import jax
import jax.numpy as jnp
from jax.experimental import pallas as pl
from jax.experimental.pallas import tpu as pltpu


def rnn_chunk_kernel(x_ref, h0_ref, wih_ref, whh_ref, b1_ref, wout_ref, bout_ref,
                     out_ref, hid_ref):
    """One (batch_tile, time_chunk) grid point; runs t_chunk recurrence steps.

    x_ref   : (t_chunk, Bt, I)      inputs for this chunk (compute dtype)
    h0_ref  : (Bt, H1)              initial hidden state (f32)
    w*_ref  : weights (compute dtype) / biases (f32), resident for the whole grid
    out_ref : (1, Bt, t_chunk*O)    lane-dense per-chunk outputs (f32)
    hid_ref : (Bt, H1)              hidden state, VMEM-resident across time chunks (f32)
    """
    c_idx = pl.program_id(1)
    t_chunk = x_ref.shape[0]
    H1 = hid_ref.shape[-1]
    O = wout_ref.shape[-1] - H1

    @pl.when(c_idx == 0)
    def _():
        hid_ref[...] = h0_ref[...]

    wih = wih_ref[...]
    whh = whh_ref[...]
    b1 = b1_ref[...]
    wout = wout_ref[...]
    bout = bout_ref[...]

    h = hid_ref[...]                      # f32 carry
    outs = []
    # Static unrolled loop (t_chunk is small) — full LLO visibility, static lane offsets.
    for t in range(t_chunk):
        x_t = x_ref[t]                    # (Bt, I)
        # relu(cat(x, h) @ W1^T + b1) == relu(x@W_ih + h@W_hh + b1)
        z = (jnp.dot(x_t, wih, preferred_element_type=jnp.float32)
             + jnp.dot(h.astype(whh.dtype), whh, preferred_element_type=jnp.float32)
             + b1)
        c_act = jnp.maximum(z, 0.0)       # f32 relu (v5e-safe)
        # Fused [W3^T | W2^T]: output slice is lane-0 aligned, hidden slice follows.
        fused = jnp.dot(c_act.astype(wout.dtype), wout,
                        preferred_element_type=jnp.float32) + bout
        outs.append(jnp.tanh(fused[:, :O]))
        h = fused[:, O:]                  # f32 recurrent state

    hid_ref[...] = h
    out_ref[0] = jnp.concatenate(outs, axis=-1)   # one lane-dense store per chunk


def _pick_time_chunk(T, max_chunk=16):
    for c in range(min(T, max_chunk), 0, -1):
        if T % c == 0:
            return c
    return 1


def rnn_forward_seq(xs, h0, kernel_params, *, b_tile=None, t_chunk=None,
                    compute_dtype=jnp.float32):
    """Run the recurrence over a whole sequence in one kernel launch.

    xs : (T, B, input_size)   h0 : (B, H1)
    returns (outputs (T, B, O) f32, final_hidden (B, H1) f32)

    compute_dtype: dtype of the MXU operands (x / weights). Accumulation, biases,
    relu/tanh and the carried hidden state stay float32.
    """
    wih_t, whh_t, b1, wout_t, bout = kernel_params
    T, B, I = xs.shape
    H1 = h0.shape[-1]
    H2 = wih_t.shape[-1]
    HO = wout_t.shape[-1]
    O = HO - H1

    # Sublane granularity of the compute dtype (f32: 8, bf16: 16).
    sub = 8 if jnp.dtype(compute_dtype).itemsize == 4 else 16

    if b_tile is None:
        b_tile = min(B, 128)
        # Keep >= 2 batch tiles when cheaply possible (v7x megacore split).
        if B // b_tile < 2 and B % (2 * sub) == 0:
            b_tile = B // 2
    assert B % b_tile == 0
    assert b_tile == B or b_tile % sub == 0
    nb = B // b_tile

    if t_chunk is None:
        t_chunk = _pick_time_chunk(T)
    assert T % t_chunk == 0
    nc = T // t_chunk

    xs_c = xs.astype(compute_dtype)
    wih_c = wih_t.astype(compute_dtype)
    whh_c = whh_t.astype(compute_dtype)
    wout_c = wout_t.astype(compute_dtype)

    const2 = lambda b, c: (0, 0)          # weights/biases: resident, DMA'd once

    out2, hid = pl.pallas_call(
        rnn_chunk_kernel,
        out_shape=(
            jax.ShapeDtypeStruct((nc, B, t_chunk * O), jnp.float32),
            jax.ShapeDtypeStruct((B, H1), jnp.float32),
        ),
        grid_spec=pltpu.PrefetchScalarGridSpec(
            num_scalar_prefetch=0,
            grid=(nb, nc),                                    # batch outer, time inner
            in_specs=[
                pl.BlockSpec((t_chunk, b_tile, I), lambda b, c: (c, b, 0)),  # x chunk
                pl.BlockSpec((b_tile, H1), lambda b, c: (b, 0)),             # h0
                pl.BlockSpec((I, H2), const2),                               # W_ih^T
                pl.BlockSpec((H1, H2), const2),                              # W_hh^T
                pl.BlockSpec((1, H2), const2),                               # b1
                pl.BlockSpec((H2, HO), const2),                              # [W3^T|W2^T]
                pl.BlockSpec((1, HO), const2),                               # [b3 | b2]
            ],
            out_specs=(
                pl.BlockSpec((1, b_tile, t_chunk * O), lambda b, c: (c, b, 0)),
                pl.BlockSpec((b_tile, H1), lambda b, c: (b, 0)),  # resident carry
            ),
        ),
        compiler_params=pltpu.CompilerParams(
            dimension_semantics=("parallel", "arbitrary")),
    )(xs_c, h0, wih_c, whh_c, b1, wout_c, bout)

    # (nc, B, t_chunk*O) -> (T, B, O): wrapper-side layout plumbing only.
    out = out2.reshape(nc, B, t_chunk, O).transpose(0, 2, 1, 3).reshape(T, B, O)
    return out, hid
    # TODO(synk): at production shapes sweep t_chunk / b_tile / pipeline_mode and set
    # vmem_limit_bytes explicitly for v7x's 64 MiB VMEM.


def init_torch_params(key, input_size, hidden_size1, hidden_size2, output_size):
    """Parameters in PyTorch nn.Linear layout (W: (out, in), b: (out,))."""
    ks = jax.random.split(key, 6)
    C = input_size + hidden_size1

    def uniform(k, shape, fan_in):
        bound = 1.0 / jnp.sqrt(jnp.float32(fan_in))
        return jax.random.uniform(k, shape, jnp.float32, -bound, bound)

    W1 = uniform(ks[0], (hidden_size2, C), C)
    b1 = uniform(ks[1], (hidden_size2,), C)
    W2 = uniform(ks[2], (hidden_size1, hidden_size2), hidden_size2)
    b2 = uniform(ks[3], (hidden_size1,), hidden_size2)
    W3 = uniform(ks[4], (output_size, hidden_size2), hidden_size2)
    b3 = uniform(ks[5], (output_size,), hidden_size2)
    return W1, b1, W2, b2, W3, b3


def prepare_kernel_params(torch_params, input_size):
    """Pre-transpose / split / fuse the nn.Linear weights for the kernel layout."""
    W1, b1, W2, b2, W3, b3 = torch_params
    wih_t = W1[:, :input_size].T                       # (I, H2)
    whh_t = W1[:, input_size:].T                       # (H1, H2)
    b1_r = b1[None, :]                                 # (1, H2)
    # Output columns first (lane-0 aligned streamed slice), hidden columns after.
    wout_t = jnp.concatenate([W3.T, W2.T], axis=1)     # (H2, O + H1)
    bout = jnp.concatenate([b3, b2])[None, :]          # (1, O + H1)
    return wih_t, whh_t, b1_r, wout_t, bout


if __name__ == "__main__":
    input_size, hidden_size1, hidden_size2, output_size = 16, 32, 32, 8
    T, B = 8, 16                                       # sequence length, batch

    key = jax.random.PRNGKey(0)
    k_params, k_inp = jax.random.split(key)
    torch_params = init_torch_params(k_params, input_size, hidden_size1,
                                     hidden_size2, output_size)
    kernel_params = prepare_kernel_params(torch_params, input_size)

    xs = jax.random.normal(k_inp, (T, B, input_size), jnp.float32)
    h0 = jnp.zeros((B, hidden_size1), jnp.float32)     # init_hidden() per sequence

    outputs, final_hidden = rnn_forward_seq(xs, h0, kernel_params)
    jax.block_until_ready((outputs, final_hidden))

    # Pure-JAX step-by-step reference using the original module's math/layout.
    W1, b1, W2, b2, W3, b3 = torch_params
    hp = jax.lax.Precision.HIGHEST
    h = h0
    ref_outs = []
    for t in range(T):
        combined = jnp.concatenate([xs[t], h], axis=-1)
        c = jnp.maximum(jnp.dot(combined, W1.T, precision=hp) + b1, 0.0)
        h = jnp.dot(c, W2.T, precision=hp) + b2
        ref_outs.append(jnp.tanh(jnp.dot(c, W3.T, precision=hp) + b3))
    ref_outs = jnp.stack(ref_outs)

    assert outputs.shape == (T, B, output_size)
    assert final_hidden.shape == (B, hidden_size1)
    assert jnp.allclose(outputs, ref_outs, atol=1e-4, rtol=1e-4)
    assert jnp.allclose(final_hidden, h, atol=1e-4, rtol=1e-4)

    # bf16 MXU-operand path (v6e/v7x): f32 accumulation / recurrent state / elementwise.
    out_bf16, hid_bf16 = rnn_forward_seq(xs, h0, kernel_params,
                                         compute_dtype=jnp.bfloat16)
    jax.block_until_ready((out_bf16, hid_bf16))
    assert bool(jnp.all(jnp.isfinite(out_bf16))) and bool(jnp.all(jnp.isfinite(hid_bf16)))
    assert float(jnp.max(jnp.abs(out_bf16 - ref_outs))) < 0.15   # tanh-bounded outputs

    print("KERNEL_OK")
</pallas_src>

<mosaic_0001>
module attributes {stable_mosaic.version = 11 : i64} {
  func.func @rnn_chunk_kernel(%arg0: i32, %arg1: i32, %arg2: memref<8x8x16xf32, #tpu.memory_space<vmem>>, %arg3: memref<8x32xf32, #tpu.memory_space<vmem>>, %arg4: memref<16x32xf32, #tpu.memory_space<vmem>>, %arg5: memref<32x32xf32, #tpu.memory_space<vmem>>, %arg6: memref<1x32xf32, #tpu.memory_space<vmem>>, %arg7: memref<32x40xf32, #tpu.memory_space<vmem>>, %arg8: memref<1x40xf32, #tpu.memory_space<vmem>>, %arg9: memref<1x8x64xf32, #tpu.memory_space<vmem>>, %arg10: memref<8x32xf32, #tpu.memory_space<vmem>>) attributes {dimension_semantics = [#tpu.dimension_semantics<parallel>, #tpu.dimension_semantics<arbitrary>], iteration_bounds = array<i64: 2, 1>, scalar_prefetch = 0 : i64, scratch_operands = 0 : i64, tpu.core_type = #tpu.core_type<tc>, window_params = [{transform_indices = @transform_0, window_bounds = array<i64: 8, 8, 16>}, {transform_indices = @transform_1, window_bounds = array<i64: 8, 32>}, {pipeline_mode = #tpu.pipeline_mode<synchronous>, transform_indices = @transform_2, window_bounds = array<i64: 16, 32>}, {pipeline_mode = #tpu.pipeline_mode<synchronous>, transform_indices = @transform_3, window_bounds = array<i64: 32, 32>}, {pipeline_mode = #tpu.pipeline_mode<synchronous>, transform_indices = @transform_4, window_bounds = array<i64: 1, 32>}, {pipeline_mode = #tpu.pipeline_mode<synchronous>, transform_indices = @transform_5, window_bounds = array<i64: 32, 40>}, {pipeline_mode = #tpu.pipeline_mode<synchronous>, transform_indices = @transform_6, window_bounds = array<i64: 1, 40>}, {transform_indices = @transform_7, window_bounds = array<i64: 1, 8, 64>}, {transform_indices = @transform_8, window_bounds = array<i64: 8, 32>}]} {
    %c0_i32 = arith.constant 0 : i32
    %0 = arith.cmpi eq, %arg1, %c0_i32 : i32
    %1 = arith.extui %0 : i1 to i32
    %c0_i32_0 = arith.constant 0 : i32
    %2 = arith.cmpi ne, %1, %c0_i32_0 : i32
    scf.if %2 {
      %c0_65 = arith.constant 0 : index
      %c0_66 = arith.constant 0 : index
      %134 = vector.load %arg3[%c0_65, %c0_66] : memref<8x32xf32, #tpu.memory_space<vmem>>, vector<8x32xf32>
      %c0_67 = arith.constant 0 : index
      %c0_68 = arith.constant 0 : index
      %135 = vector.load %arg10[%c0_67, %c0_68] : memref<8x32xf32, #tpu.memory_space<vmem>>, vector<8x32xf32>
      tpu.vector_store %arg10[%c0_67, %c0_68], %134 {strides = array<i32>} : memref<8x32xf32, #tpu.memory_space<vmem>>, vector<8x32xf32>,
    } else {
    }
    %c0 = arith.constant 0 : index
    %c0_1 = arith.constant 0 : index
    %3 = vector.load %arg4[%c0, %c0_1] : memref<16x32xf32, #tpu.memory_space<vmem>>, vector<16x32xf32>
    %c0_2 = arith.constant 0 : index
    %c0_3 = arith.constant 0 : index
    %4 = vector.load %arg5[%c0_2, %c0_3] : memref<32x32xf32, #tpu.memory_space<vmem>>, vector<32x32xf32>
    %c0_4 = arith.constant 0 : index
    %c0_5 = arith.constant 0 : index
    %5 = vector.load %arg6[%c0_4, %c0_5] : memref<1x32xf32, #tpu.memory_space<vmem>>, vector<1x32xf32>
    %c0_6 = arith.constant 0 : index
    %c0_7 = arith.constant 0 : index
    %6 = vector.load %arg7[%c0_6, %c0_7] : memref<32x40xf32, #tpu.memory_space<vmem>>, vector<32x40xf32>
    %c0_8 = arith.constant 0 : index
    %c0_9 = arith.constant 0 : index
    %7 = vector.load %arg8[%c0_8, %c0_9] : memref<1x40xf32, #tpu.memory_space<vmem>>, vector<1x40xf32>
    %c0_10 = arith.constant 0 : index
    %c0_11 = arith.constant 0 : index
    %8 = vector.load %arg10[%c0_10, %c0_11] : memref<8x32xf32, #tpu.memory_space<vmem>>, vector<8x32xf32>
    %c0_12 = arith.constant 0 : index
    %c0_13 = arith.constant 0 : index
    %c0_14 = arith.constant 0 : index
    %9 = vector.load %arg2[%c0_12, %c0_13, %c0_14] : memref<8x8x16xf32, #tpu.memory_space<vmem>>, vector<1x8x16xf32>
    %10 = vector.shape_cast %9 : vector<1x8x16xf32> to vector<8x16xf32>
    %cst = arith.constant dense<0.000000e+00> : vector<8x32xf32>
    %11 = tpu.matmul %10, %3, %cst {dimension_numbers = #tpu.dot_dimension_numbers<[1], [0], [0], [1], [0, 0, 1, 1], [], []>} : vector<8x16xf32>, vector<16x32xf32>, vector<8x32xf32> -> vector<8x32xf32>
    %cst_15 = arith.constant dense<0.000000e+00> : vector<8x32xf32>
    %12 = tpu.matmul %8, %4, %cst_15 {dimension_numbers = #tpu.dot_dimension_numbers<[1], [0], [0], [1], [0, 0, 1, 1], [], []>} : vector<8x32xf32>, vector<32x32xf32>, vector<8x32xf32> -> vector<8x32xf32>
    %13 = arith.addf %11, %12 : vector<8x32xf32>
    %14 = vector.broadcast %5 : vector<1x32xf32> to vector<8x32xf32>
    %15 = arith.addf %13, %14 : vector<8x32xf32>
    %cst_16 = arith.constant 0.000000e+00 : f32
    %16 = vector.broadcast %cst_16 : f32 to vector<8x32xf32>
    %17 = arith.maximumf %15, %16 : vector<8x32xf32>
    %cst_17 = arith.constant dense<0.000000e+00> : vector<8x40xf32>
    %18 = tpu.matmul %17, %6, %cst_17 {dimension_numbers = #tpu.dot_dimension_numbers<[1], [0], [0], [1], [0, 0, 1, 1], [], []>} : vector<8x32xf32>, vector<32x40xf32>, vector<8x40xf32> -> vector<8x40xf32>
    %19 = vector.broadcast %7 : vector<1x40xf32> to vector<8x40xf32>
    %20 = arith.addf %18, %19 : vector<8x40xf32>
    %21 = vector.extract_strided_slice %20 {offsets = [0, 0], sizes = [8, 8], strides = [1, 1]} : vector<8x40xf32> to vector<8x8xf32>
    %22 = math.tanh %21 : vector<8x8xf32>
    %23 = vector.extract_strided_slice %20 {offsets = [0, 8], sizes = [8, 32], strides = [1, 1]} : vector<8x40xf32> to vector<8x32xf32>
    %c1 = arith.constant 1 : index
    %c0_18 = arith.constant 0 : index
    %c0_19 = arith.constant 0 : index
    %24 = vector.load %arg2[%c1, %c0_18, %c0_19] : memref<8x8x16xf32, #tpu.memory_space<vmem>>, vector<1x8x16xf32>
    %25 = vector.shape_cast %24 : vector<1x8x16xf32> to vector<8x16xf32>
    %cst_20 = arith.constant dense<0.000000e+00> : vector<8x32xf32>
    %26 = tpu.matmul %25, %3, %cst_20 {dimension_numbers = #tpu.dot_dimension_numbers<[1], [0], [0], [1], [0, 0, 1, 1], [], []>} : vector<8x16xf32>, vector<16x32xf32>, vector<8x32xf32> -> vector<8x32xf32>
    %cst_21 = arith.constant dense<0.000000e+00> : vector<8x32xf32>
    %27 = tpu.matmul %23, %4, %cst_21 {dimension_numbers = #tpu.dot_dimension_numbers<[1], [0], [0], [1], [0, 0, 1, 1], [], []>} : vector<8x32xf32>, vector<32x32xf32>, vector<8x32xf32> -> vector<8x32xf32>
    %28 = arith.addf %26, %27 : vector<8x32xf32>
    %29 = vector.broadcast %5 : vector<1x32xf32> to vector<8x32xf32>
    %30 = arith.addf %28, %29 : vector<8x32xf32>
    %cst_22 = arith.constant 0.000000e+00 : f32
    %31 = vector.broadcast %cst_22 : f32 to vector<8x32xf32>
    %32 = arith.maximumf %30, %31 : vector<8x32xf32>
    %cst_23 = arith.constant dense<0.000000e+00> : vector<8x40xf32>
    %33 = tpu.matmul %32, %6, %cst_23 {dimension_numbers = #tpu.dot_dimension_numbers<[1], [0], [0], [1], [0, 0, 1, 1], [], []>} : vector<8x32xf32>, vector<32x40xf32>, vector<8x40xf32> -> vector<8x40xf32>
    %34 = vector.broadcast %7 : vector<1x40xf32> to vector<8x40xf32>
    %35 = arith.addf %33, %34 : vector<8x40xf32>
    %36 = vector.extract_strided_slice %35 {offsets = [0, 0], sizes = [8, 8], strides = [1, 1]} : vector<8x40xf32> to vector<8x8xf32>
    %37 = math.tanh %36 : vector<8x8xf32>
    %38 = vector.extract_strided_slice %35 {offsets = [0, 8], sizes = [8, 32], strides = [1, 1]} : vector<8x40xf32> to vector<8x32xf32>
    %c2 = arith.constant 2 : index
    %c0_24 = arith.constant 0 : index
    %c0_25 = arith.constant 0 : index
    %39 = vector.load %arg2[%c2, %c0_24, %c0_25] : memref<8x8x16xf32, #tpu.memory_space<vmem>>, vector<1x8x16xf32>
    %40 = vector.shape_cast %39 : vector<1x8x16xf32> to vector<8x16xf32>
    %cst_26 = arith.constant dense<0.000000e+00> : vector<8x32xf32>
    %41 = tpu.matmul %40, %3, %cst_26 {dimension_numbers = #tpu.dot_dimension_numbers<[1], [0], [0], [1], [0, 0, 1, 1], [], []>} : vector<8x16xf32>, vector<16x32xf32>, vector<8x32xf32> -> vector<8x32xf32>
    %cst_27 = arith.constant dense<0.000000e+00> : vector<8x32xf32>
    %42 = tpu.matmul %38, %4, %cst_27 {dimension_numbers = #tpu.dot_dimension_numbers<[1], [0], [0], [1], [0, 0, 1, 1], [], []>} : vector<8x32xf32>, vector<32x32xf32>, vector<8x32xf32> -> vector<8x32xf32>
    %43 = arith.addf %41, %42 : vector<8x32xf32>
    %44 = vector.broadcast %5 : vector<1x32xf32> to vector<8x32xf32>
    %45 = arith.addf %43, %44 : vector<8x32xf32>
    %cst_28 = arith.constant 0.000000e+00 : f32
    %46 = vector.broadcast %cst_28 : f32 to vector<8x32xf32>
    %47 = arith.maximumf %45, %46 : vector<8x32xf32>
    %cst_29 = arith.constant dense<0.000000e+00> : vector<8x40xf32>
    %48 = tpu.matmul %47, %6, %cst_29 {dimension_numbers = #tpu.dot_dimension_numbers<[1], [0], [0], [1], [0, 0, 1, 1], [], []>} : vector<8x32xf32>, vector<32x40xf32>, vector<8x40xf32> -> vector<8x40xf32>
    %49 = vector.broadcast %7 : vector<1x40xf32> to vector<8x40xf32>
    %50 = arith.addf %48, %49 : vector<8x40xf32>
    %51 = vector.extract_strided_slice %50 {offsets = [0, 0], sizes = [8, 8], strides = [1, 1]} : vector<8x40xf32> to vector<8x8xf32>
    %52 = math.tanh %51 : vector<8x8xf32>
    %53 = vector.extract_strided_slice %50 {offsets = [0, 8], sizes = [8, 32], strides = [1, 1]} : vector<8x40xf32> to vector<8x32xf32>
    %c3 = arith.constant 3 : index
    %c0_30 = arith.constant 0 : index
    %c0_31 = arith.constant 0 : index
    %54 = vector.load %arg2[%c3, %c0_30, %c0_31] : memref<8x8x16xf32, #tpu.memory_space<vmem>>, vector<1x8x16xf32>
    %55 = vector.shape_cast %54 : vector<1x8x16xf32> to vector<8x16xf32>
    %cst_32 = arith.constant dense<0.000000e+00> : vector<8x32xf32>
    %56 = tpu.matmul %55, %3, %cst_32 {dimension_numbers = #tpu.dot_dimension_numbers<[1], [0], [0], [1], [0, 0, 1, 1], [], []>} : vector<8x16xf32>, vector<16x32xf32>, vector<8x32xf32> -> vector<8x32xf32>
    %cst_33 = arith.constant dense<0.000000e+00> : vector<8x32xf32>
    %57 = tpu.matmul %53, %4, %cst_33 {dimension_numbers = #tpu.dot_dimension_numbers<[1], [0], [0], [1], [0, 0, 1, 1], [], []>} : vector<8x32xf32>, vector<32x32xf32>, vector<8x32xf32> -> vector<8x32xf32>
    %58 = arith.addf %56, %57 : vector<8x32xf32>
    %59 = vector.broadcast %5 : vector<1x32xf32> to vector<8x32xf32>
    %60 = arith.addf %58, %59 : vector<8x32xf32>
    %cst_34 = arith.constant 0.000000e+00 : f32
    %61 = vector.broadcast %cst_34 : f32 to vector<8x32xf32>
    %62 = arith.maximumf %60, %61 : vector<8x32xf32>
    %cst_35 = arith.constant dense<0.000000e+00> : vector<8x40xf32>
    %63 = tpu.matmul %62, %6, %cst_35 {dimension_numbers = #tpu.dot_dimension_numbers<[1], [0], [0], [1], [0, 0, 1, 1], [], []>} : vector<8x32xf32>, vector<32x40xf32>, vector<8x40xf32> -> vector<8x40xf32>
    %64 = vector.broadcast %7 : vector<1x40xf32> to vector<8x40xf32>
    %65 = arith.addf %63, %64 : vector<8x40xf32>
    %66 = vector.extract_strided_slice %65 {offsets = [0, 0], sizes = [8, 8], strides = [1, 1]} : vector<8x40xf32> to vector<8x8xf32>
    %67 = math.tanh %66 : vector<8x8xf32>
    %68 = vector.extract_strided_slice %65 {offsets = [0, 8], sizes = [8, 32], strides = [1, 1]} : vector<8x40xf32> to vector<8x32xf32>
    %c4 = arith.constant 4 : index
    %c0_36 = arith.constant 0 : index
    %c0_37 = arith.constant 0 : index
    %69 = vector.load %arg2[%c4, %c0_36, %c0_37] : memref<8x8x16xf32, #tpu.memory_space<vmem>>, vector<1x8x16xf32>
    %70 = vector.shape_cast %69 : vector<1x8x16xf32> to vector<8x16xf32>
    %cst_38 = arith.constant dense<0.000000e+00> : vector<8x32xf32>
    %71 = tpu.matmul %70, %3, %cst_38 {dimension_numbers = #tpu.dot_dimension_numbers<[1], [0], [0], [1], [0, 0, 1, 1], [], []>} : vector<8x16xf32>, vector<16x32xf32>, vector<8x32xf32> -> vector<8x32xf32>
    %cst_39 = arith.constant dense<0.000000e+00> : vector<8x32xf32>
    %72 = tpu.matmul %68, %4, %cst_39 {dimension_numbers = #tpu.dot_dimension_numbers<[1], [0], [0], [1], [0, 0, 1, 1], [], []>} : vector<8x32xf32>, vector<32x32xf32>, vector<8x32xf32> -> vector<8x32xf32>
    %73 = arith.addf %71, %72 : vector<8x32xf32>
    %74 = vector.broadcast %5 : vector<1x32xf32> to vector<8x32xf32>
    %75 = arith.addf %73, %74 : vector<8x32xf32>
    %cst_40 = arith.constant 0.000000e+00 : f32
    %76 = vector.broadcast %cst_40 : f32 to vector<8x32xf32>
    %77 = arith.maximumf %75, %76 : vector<8x32xf32>
    %cst_41 = arith.constant dense<0.000000e+00> : vector<8x40xf32>
    %78 = tpu.matmul %77, %6, %cst_41 {dimension_numbers = #tpu.dot_dimension_numbers<[1], [0], [0], [1], [0, 0, 1, 1], [], []>} : vector<8x32xf32>, vector<32x40xf32>, vector<8x40xf32> -> vector<8x40xf32>
    %79 = vector.broadcast %7 : vector<1x40xf32> to vector<8x40xf32>
    %80 = arith.addf %78, %79 : vector<8x40xf32>
    %81 = vector.extract_strided_slice %80 {offsets = [0, 0], sizes = [8, 8], strides = [1, 1]} : vector<8x40xf32> to vector<8x8xf32>
    %82 = math.tanh %81 : vector<8x8xf32>
    %83 = vector.extract_strided_slice %80 {offsets = [0, 8], sizes = [8, 32], strides = [1, 1]} : vector<8x40xf32> to vector<8x32xf32>
    %c5 = arith.constant 5 : index
    %c0_42 = arith.constant 0 : index
    %c0_43 = arith.constant 0 : index
    %84 = vector.load %arg2[%c5, %c0_42, %c0_43] : memref<8x8x16xf32, #tpu.memory_space<vmem>>, vector<1x8x16xf32>
    %85 = vector.shape_cast %84 : vector<1x8x16xf32> to vector<8x16xf32>
    %cst_44 = arith.constant dense<0.000000e+00> : vector<8x32xf32>
    %86 = tpu.matmul %85, %3, %cst_44 {dimension_numbers = #tpu.dot_dimension_numbers<[1], [0], [0], [1], [0, 0, 1, 1], [], []>} : vector<8x16xf32>, vector<16x32xf32>, vector<8x32xf32> -> vector<8x32xf32>
    %cst_45 = arith.constant dense<0.000000e+00> : vector<8x32xf32>
    %87 = tpu.matmul %83, %4, %cst_45 {dimension_numbers = #tpu.dot_dimension_numbers<[1], [0], [0], [1], [0, 0, 1, 1], [], []>} : vector<8x32xf32>, vector<32x32xf32>, vector<8x32xf32> -> vector<8x32xf32>
    %88 = arith.addf %86, %87 : vector<8x32xf32>
    %89 = vector.broadcast %5 : vector<1x32xf32> to vector<8x32xf32>
    %90 = arith.addf %88, %89 : vector<8x32xf32>
    %cst_46 = arith.constant 0.000000e+00 : f32
    %91 = vector.broadcast %cst_46 : f32 to vector<8x32xf32>
    %92 = arith.maximumf %90, %91 : vector<8x32xf32>
    %cst_47 = arith.constant dense<0.000000e+00> : vector<8x40xf32>
    %93 = tpu.matmul %92, %6, %cst_47 {dimension_numbers = #tpu.dot_dimension_numbers<[1], [0], [0], [1], [0, 0, 1, 1], [], []>} : vector<8x32xf32>, vector<32x40xf32>, vector<8x40xf32> -> vector<8x40xf32>
    %94 = vector.broadcast %7 : vector<1x40xf32> to vector<8x40xf32>
    %95 = arith.addf %93, %94 : vector<8x40xf32>
    %96 = vector.extract_strided_slice %95 {offsets = [0, 0], sizes = [8, 8], strides = [1, 1]} : vector<8x40xf32> to vector<8x8xf32>
    %97 = math.tanh %96 : vector<8x8xf32>
    %98 = vector.extract_strided_slice %95 {offsets = [0, 8], sizes = [8, 32], strides = [1, 1]} : vector<8x40xf32> to vector<8x32xf32>
    %c6 = arith.constant 6 : index
    %c0_48 = arith.constant 0 : index
    %c0_49 = arith.constant 0 : index
    %99 = vector.load %arg2[%c6, %c0_48, %c0_49] : memref<8x8x16xf32, #tpu.memory_space<vmem>>, vector<1x8x16xf32>
    %100 = vector.shape_cast %99 : vector<1x8x16xf32> to vector<8x16xf32>
    %cst_50 = arith.constant dense<0.000000e+00> : vector<8x32xf32>
    %101 = tpu.matmul %100, %3, %cst_50 {dimension_numbers = #tpu.dot_dimension_numbers<[1], [0], [0], [1], [0, 0, 1, 1], [], []>} : vector<8x16xf32>, vector<16x32xf32>, vector<8x32xf32> -> vector<8x32xf32>
    %cst_51 = arith.constant dense<0.000000e+00> : vector<8x32xf32>
    %102 = tpu.matmul %98, %4, %cst_51 {dimension_numbers = #tpu.dot_dimension_numbers<[1], [0], [0], [1], [0, 0, 1, 1], [], []>} : vector<8x32xf32>, vector<32x32xf32>, vector<8x32xf32> -> vector<8x32xf32>
    %103 = arith.addf %101, %102 : vector<8x32xf32>
    %104 = vector.broadcast %5 : vector<1x32xf32> to vector<8x32xf32>
    %105 = arith.addf %103, %104 : vector<8x32xf32>
    %cst_52 = arith.constant 0.000000e+00 : f32
    %106 = vector.broadcast %cst_52 : f32 to vector<8x32xf32>
    %107 = arith.maximumf %105, %106 : vector<8x32xf32>
    %cst_53 = arith.constant dense<0.000000e+00> : vector<8x40xf32>
    %108 = tpu.matmul %107, %6, %cst_53 {dimension_numbers = #tpu.dot_dimension_numbers<[1], [0], [0], [1], [0, 0, 1, 1], [], []>} : vector<8x32xf32>, vector<32x40xf32>, vector<8x40xf32> -> vector<8x40xf32>
    %109 = vector.broadcast %7 : vector<1x40xf32> to vector<8x40xf32>
    %110 = arith.addf %108, %109 : vector<8x40xf32>
    %111 = vector.extract_strided_slice %110 {offsets = [0, 0], sizes = [8, 8], strides = [1, 1]} : vector<8x40xf32> to vector<8x8xf32>
    %112 = math.tanh %111 : vector<8x8xf32>
    %113 = vector.extract_strided_slice %110 {offsets = [0, 8], sizes = [8, 32], strides = [1, 1]} : vector<8x40xf32> to vector<8x32xf32>
    %c7 = arith.constant 7 : index
    %c0_54 = arith.constant 0 : index
    %c0_55 = arith.constant 0 : index
    %114 = vector.load %arg2[%c7, %c0_54, %c0_55] : memref<8x8x16xf32, #tpu.memory_space<vmem>>, vector<1x8x16xf32>
    %115 = vector.shape_cast %114 : vector<1x8x16xf32> to vector<8x16xf32>
    %cst_56 = arith.constant dense<0.000000e+00> : vector<8x32xf32>
    %116 = tpu.matmul %115, %3, %cst_56 {dimension_numbers = #tpu.dot_dimension_numbers<[1], [0], [0], [1], [0, 0, 1, 1], [], []>} : vector<8x16xf32>, vector<16x32xf32>, vector<8x32xf32> -> vector<8x32xf32>
    %cst_57 = arith.constant dense<0.000000e+00> : vector<8x32xf32>
    %117 = tpu.matmul %113, %4, %cst_57 {dimension_numbers = #tpu.dot_dimension_numbers<[1], [0], [0], [1], [0, 0, 1, 1], [], []>} : vector<8x32xf32>, vector<32x32xf32>, vector<8x32xf32> -> vector<8x32xf32>
    %118 = arith.addf %116, %117 : vector<8x32xf32>
    %119 = vector.broadcast %5 : vector<1x32xf32> to vector<8x32xf32>
    %120 = arith.addf %118, %119 : vector<8x32xf32>
    %cst_58 = arith.constant 0.000000e+00 : f32
    %121 = vector.broadcast %cst_58 : f32 to vector<8x32xf32>
    %122 = arith.maximumf %120, %121 : vector<8x32xf32>
    %cst_59 = arith.constant dense<0.000000e+00> : vector<8x40xf32>
    %123 = tpu.matmul %122, %6, %cst_59 {dimension_numbers = #tpu.dot_dimension_numbers<[1], [0], [0], [1], [0, 0, 1, 1], [], []>} : vector<8x32xf32>, vector<32x40xf32>, vector<8x40xf32> -> vector<8x40xf32>
    %124 = vector.broadcast %7 : vector<1x40xf32> to vector<8x40xf32>
    %125 = arith.addf %123, %124 : vector<8x40xf32>
    %126 = vector.extract_strided_slice %125 {offsets = [0, 0], sizes = [8, 8], strides = [1, 1]} : vector<8x40xf32> to vector<8x8xf32>
    %127 = math.tanh %126 : vector<8x8xf32>
    %128 = vector.extract_strided_slice %125 {offsets = [0, 8], sizes = [8, 32], strides = [1, 1]} : vector<8x40xf32> to vector<8x32xf32>
    %c0_60 = arith.constant 0 : index
    %c0_61 = arith.constant 0 : index
    %129 = vector.load %arg10[%c0_60, %c0_61] : memref<8x32xf32, #tpu.memory_space<vmem>>, vector<8x32xf32>
    tpu.vector_store %arg10[%c0_60, %c0_61], %128 {strides = array<i32>} : memref<8x32xf32, #tpu.memory_space<vmem>>, vector<8x32xf32>,
    %130 = tpu.concatenate %22, %37, %52, %67, %82, %97, %112, %127 in 1 : vector<8x8xf32>, vector<8x8xf32>, vector<8x8xf32>, vector<8x8xf32>, vector<8x8xf32>, vector<8x8xf32>, vector<8x8xf32>, vector<8x8xf32> -> vector<8x64xf32>
    %c0_62 = arith.constant 0 : index
    %c0_63 = arith.constant 0 : index
    %c0_64 = arith.constant 0 : index
    %131 = vector.load %arg9[%c0_62, %c0_63, %c0_64] : memref<1x8x64xf32, #tpu.memory_space<vmem>>, vector<1x8x64xf32>
    %132 = vector.shape_cast %131 : vector<1x8x64xf32> to vector<8x64xf32>
    %133 = vector.shape_cast %130 : vector<8x64xf32> to vector<1x8x64xf32>
    tpu.vector_store %arg9[%c0_62, %c0_63, %c0_64], %133 {strides = array<i32>} : memref<1x8x64xf32, #tpu.memory_space<vmem>>, vector<1x8x64xf32>,
    return
  }
  func.func @transform_0(%arg0: i32, %arg1: i32) -> (i32, i32, i32) {
    %c0_i32 = arith.constant 0 : i32
    %c0_i32_0 = arith.constant 0 : i32
    return %arg1, %arg0, %c0_i32 : i32, i32, i32
  }
  func.func @transform_1(%arg0: i32, %arg1: i32) -> (i32, i32) {
    %c0_i32 = arith.constant 0 : i32
    %c0_i32_0 = arith.constant 0 : i32
    return %arg0, %c0_i32 : i32, i32
  }
  func.func @transform_2(%arg0: i32, %arg1: i32) -> (i32, i32) {
    %c0_i32 = arith.constant 0 : i32
    %c0_i32_0 = arith.constant 0 : i32
    %c0_i32_1 = arith.constant 0 : i32
    return %c0_i32, %c0_i32_0 : i32, i32
  }
  func.func @transform_3(%arg0: i32, %arg1: i32) -> (i32, i32) {
    %c0_i32 = arith.constant 0 : i32
    %c0_i32_0 = arith.constant 0 : i32
    %c0_i32_1 = arith.constant 0 : i32
    return %c0_i32, %c0_i32_0 : i32, i32
  }
  func.func @transform_4(%arg0: i32, %arg1: i32) -> (i32, i32) {
    %c0_i32 = arith.constant 0 : i32
    %c0_i32_0 = arith.constant 0 : i32
    %c0_i32_1 = arith.constant 0 : i32
    return %c0_i32, %c0_i32_0 : i32, i32
  }
  func.func @transform_5(%arg0: i32, %arg1: i32) -> (i32, i32) {
    %c0_i32 = arith.constant 0 : i32
    %c0_i32_0 = arith.constant 0 : i32
    %c0_i32_1 = arith.constant 0 : i32
    return %c0_i32, %c0_i32_0 : i32, i32
  }
  func.func @transform_6(%arg0: i32, %arg1: i32) -> (i32, i32) {
    %c0_i32 = arith.constant 0 : i32
    %c0_i32_0 = arith.constant 0 : i32
    %c0_i32_1 = arith.constant 0 : i32
    return %c0_i32, %c0_i32_0 : i32, i32
  }
  func.func @transform_7(%arg0: i32, %arg1: i32) -> (i32, i32, i32) {
    %c0_i32 = arith.constant 0 : i32
    %c0_i32_0 = arith.constant 0 : i32
    return %arg1, %arg0, %c0_i32 : i32, i32, i32
  }
  func.func @transform_8(%arg0: i32, %arg1: i32) -> (i32, i32) {
    %c0_i32 = arith.constant 0 : i32
    %c0_i32_0 = arith.constant 0 : i32
    return %arg0, %c0_i32 : i32, i32
  }
}

</mosaic_0001>

<llo_original>
// kernel: tpu_custom_call.1
$region0: #{tpu_custom_call.1}
  #allocation0 [shape = 'u32[]', space=smem, size = 0x4, offset = 0x4, fixed_abs, tag = 'smem constant byte address 0x4 - core index']
  #allocation1 [shape = 'u32[144,128]{1,0:T(1,128)}', space=vmem, size = 0x12000, scoped, tag = 'internal scratch']
  %s0 = inlined_call_operand.hbm [shape: f32[8,16,16], index: 0, kind: input, shape index: {}]
  %s1 = inlined_call_operand.hbm [shape: f32[16,32], index: 1, kind: input, shape index: {}]
  %s2 = inlined_call_operand.hbm [shape: f32[16,32], index: 2, kind: input, shape index: {}]
  %s3 = inlined_call_operand.hbm [shape: f32[32,32], index: 3, kind: input, shape index: {}]
  %s4 = inlined_call_operand.vmem [shape: f32[1,32], index: 4, kind: input, shape index: {}]
  %s5 = inlined_call_operand.hbm [shape: f32[32,40], index: 5, kind: input, shape index: {}]
  %s6 = inlined_call_operand.vmem [shape: f32[1,40], index: 6, kind: input, shape index: {}]
  %s7 = inlined_call_operand.hbm [shape: f32[1,16,64], index: 7, kind: output, shape index: {0}]
  %s8 = inlined_call_operand.hbm [shape: f32[16,32], index: 8, kind: output, shape index: {1}]
  %9 = xla_tuple %s7, %s8
  %s10 = sld [smem:[#allocation0]]
  $region93: #{tpu_custom_call.1} parent=0
    _
  %s12 = ssub.s32 1, %s10
  %s13 = scalar_select 0, %s12, %s10
  $region1: #{tpu_custom_call.1} parent=0
    #allocation2 [shape = 'u8[65536]{0}', space=vmem, size = 0x10000, scoped, tag = 'input window, operand 0']
    #allocation3 [shape = 's32[2]{0}', space=sflag, size = 0x8, scoped, tag = 'scoped memory for tpu_custom_call.1']
    #allocation4 [shape = 's32[2]{0}', space=sflag, size = 0x8, scoped, tag = 'scoped memory for tpu_custom_call.1']
    #allocation5 [shape = 'u8[8192]{0}', space=vmem, size = 0x2000, scoped, tag = 'input window, operand 1']
    #allocation6 [shape = 's32[2]{0}', space=sflag, size = 0x8, scoped, tag = 'scoped memory for tpu_custom_call.1']
    #allocation7 [shape = 'u8[8192]{0}', space=vmem, size = 0x2000, scoped, tag = 'input window, operand 2, single buffered']
    #allocation8 [shape = 'u8[16384]{0}', space=vmem, size = 0x4000, scoped, tag = 'input window, operand 3, single buffered']
    #allocation9 [shape = 's32[1]{0}', space=sflag, size = 0x4, scoped, tag = 'scoped memory for tpu_custom_call.1']
    #allocation10 [shape = 'u8[16384]{0}', space=vmem, size = 0x4000, scoped, tag = 'input window, operand 5, single buffered']
    #allocation11 [shape = 'u8[8192]{0}', space=vmem, size = 0x2000, scoped, tag = 'output window, operand 0']
    #allocation12 [shape = 'u8[8192]{0}', space=vmem, size = 0x2000, scoped, tag = 'output window, operand 1']
    #allocation13 [shape = 's32[2]{0}', space=sflag, size = 0x8, scoped, tag = 'scoped memory for tpu_custom_call.1']
    %14 = vsyncpa [#allocation3], 0
    %s15 = scalar_lea.sflag [#allocation3], 1
    %16 = vsyncpa %s15, 0
    %17 = vsyncpa [#allocation6], 0
    %s18 = scalar_lea.sflag [#allocation6], 1
    %19 = vsyncpa %s18, 0
    %20 = vsyncpa [#allocation9], 0
    %21 = vsyncpa [#allocation4], 0
    %s22 = scalar_lea.sflag [#allocation4], 1
    %23 = vsyncpa %s22, 0
    %24 = vsyncpa [#allocation13], 0
    %s25 = scalar_lea.sflag [#allocation13], 1
    %26 = vsyncpa %s25, 0
    loop: start=0, step=1, limit=4
    $region2: #{tpu_custom_call.1} parent=1 // loop_pre_header
      _
    $region3: #{tpu_custom_call.1} parent=1 // loop_header
      %s28 = sphi 0, %s32
      %p29 = scmp.ge.s32.totalorder %s28, 4
      %s35 = sphi 0, %s47
      %s36 = sphi 0, %s43
      %s37 = sphi 0, %s35
      %s38 = sphi 0, %s36
      %s39 = sphi 0, %s37
      %s40 = sphi 0, %s38
      %s52 = sphi 0, %s54
      %s55 = sphi 0, %s52
      %s56 = sphi 0, %s55
      %s72 = sphi 0, %s56
      %s78 = sphi 0, %s80
      %s81 = sphi 0, %s78
      %s82 = sphi 0, %s81
      %s98 = sphi 0, %s82
      %s102 = sphi 0, %s102
      %s104 = sphi 0, %s102
      %s105 = sphi 0, %s104
      %s119 = sphi 0, %s105
      %s123 = sphi 0, %s123
      %s125 = sphi 0, %s123
      %s126 = sphi 0, %s125
      %s140 = sphi 0, %s126
      %s144 = sphi 0, %s144
      %s146 = sphi 0, %s144
      %s147 = sphi 0, %s146
      %s161 = sphi 0, %s147
      %s165 = sphi 0, %s165
      %s167 = sphi 0, %s165
      %s168 = sphi 0, %s167
      %s182 = sphi 0, %s168
      %s186 = sphi 0, %s186
      %s188 = sphi 0, %s186
      %s189 = sphi 0, %s188
      %s203 = sphi 0, %s189
      %s211 = sphi 0, %s213
      %s214 = sphi 0, %s211
      %s215 = sphi 0, %s214
      %s231 = sphi 0, %s215
      %s237 = sphi 0, %s239
      %s240 = sphi 0, %s237
      %s241 = sphi 0, %s240
      %s257 = sphi 0, %s241
    $region4: #{tpu_custom_call.1} parent=1 // loop_header_branch
      %31 = sbr.rel (%p29) target = $region8
    $region5: #{tpu_custom_call.1} parent=1 // loop_body
      %s33 = ssub.s32 %s28, 1
      %s34 = ssub.s32 %s28, 2
      %s41 = sadd.s32 1, %s36
      %p42 = scmp.ge.s32.totalorder %s41, 1
      %s43 = scalar_select %p42, 0, %s41
      %s44 = sadd.s32 1, %s35
      %s45 = scalar_select %p42, %s44, %s35
      %p46 = scmp.ge.s32.totalorder %s45, 2
      %s47 = scalar_select %p46, 0, %s45
      %s48 = ssub.s32 %s36, %s43
      %s49 = ssub.s32 %s35, %s47
      %s50 = sor.u32 %s48, %s49
      %p51 = scmp.eq.s32.totalorder %s50, 0
      %s53 = sadd.s32 %s52, 1
      %s54 = scalar_select %p51, %s52, %s53
      %p57 = pneg %p51
      %p58 = scmp.eq.s32.totalorder %s28, 1
      %p59 = por %p57, %p58
      %p60 = scmp.ne.s32.totalorder %s52, %s55
      %p61 = scmp.eq.s32.totalorder %s28, 0
      %p62 = por %p60, %p61
      %p63 = scmp.ne.s32.totalorder %s52, %s55
      %p64 = scmp.eq.s32.totalorder %s33, 1
      %p65 = por %p63, %p64
      %p66 = scmp.ne.s32.totalorder %s55, %s56
      %p67 = scmp.eq.s32.totalorder %s33, 0
      %p68 = por %p66, %p67
      %p69 = scmp.ne.s32.totalorder %s55, %s56
      %p70 = scmp.eq.s32.totalorder %s34, 1
      %p71 = por %p69, %p70
      %p73 = scmp.ne.s32.totalorder %s56, %s72
      %p74 = scmp.eq.s32.totalorder %s34, 0
      %p75 = por %p73, %p74
      %s76 = ssub.s32 %s35, %s47
      %p77 = scmp.eq.s32.totalorder %s76, 0
      %s79 = sadd.s32 %s78, 1
      %s80 = scalar_select %p77, %s78, %s79
      %p83 = pneg %p77
      %p84 = scmp.eq.s32.totalorder %s28, 1
      %p85 = por %p83, %p84
      %p86 = scmp.ne.s32.totalorder %s78, %s81
      %p87 = scmp.eq.s32.totalorder %s28, 0
      %p88 = por %p86, %p87
      %p89 = scmp.ne.s32.totalorder %s78, %s81
      %p90 = scmp.eq.s32.totalorder %s33, 1
      %p91 = por %p89, %p90
      %p92 = scmp.ne.s32.totalorder %s81, %s82
      %p93 = scmp.eq.s32.totalorder %s33, 0
      %p94 = por %p92, %p93
      %p95 = scmp.ne.s32.totalorder %s81, %s82
      %p96 = scmp.eq.s32.totalorder %s34, 1
      %p97 = por %p95, %p96
      %p99 = scmp.ne.s32.totalorder %s82, %s98
      %p100 = scmp.eq.s32.totalorder %s34, 0
      %p101 = por %p99, %p100
      %s103 = sadd.s32 %s102, 1
      %p106 = scmp.eq.s32.totalorder %s28, 1
      %p107 = scmp.ne.s32.totalorder %s102, %s104
      %p108 = scmp.eq.s32.totalorder %s28, 0
      %p109 = por %p107, %p108
      %p110 = scmp.ne.s32.totalorder %s102, %s104
      %p111 = scmp.eq.s32.totalorder %s33, 1
      %p112 = por %p110, %p111
      %p113 = scmp.ne.s32.totalorder %s104, %s105
      %p114 = scmp.eq.s32.totalorder %s33, 0
      %p115 = por %p113, %p114
      %p116 = scmp.ne.s32.totalorder %s104, %s105
      %p117 = scmp.eq.s32.totalorder %s34, 1
      %p118 = por %p116, %p117
      %p120 = scmp.ne.s32.totalorder %s105, %s119
      %p121 = scmp.eq.s32.totalorder %s34, 0
      %p122 = por %p120, %p121
      %s124 = sadd.s32 %s123, 1
      %p127 = scmp.eq.s32.totalorder %s28, 1
      %p128 = scmp.ne.s32.totalorder %s123, %s125
      %p129 = scmp.eq.s32.totalorder %s28, 0
      %p130 = por %p128, %p129
      %p131 = scmp.ne.s32.totalorder %s123, %s125
      %p132 = scmp.eq.s32.totalorder %s33, 1
      %p133 = por %p131, %p132
      %p134 = scmp.ne.s32.totalorder %s125, %s126
      %p135 = scmp.eq.s32.totalorder %s33, 0
      %p136 = por %p134, %p135
      %p137 = scmp.ne.s32.totalorder %s125, %s126
      %p138 = scmp.eq.s32.totalorder %s34, 1
      %p139 = por %p137, %p138
      %p141 = scmp.ne.s32.totalorder %s126, %s140
      %p142 = scmp.eq.s32.totalorder %s34, 0
      %p143 = por %p141, %p142
      %s145 = sadd.s32 %s144, 1
      %p148 = scmp.eq.s32.totalorder %s28, 1
      %p149 = scmp.ne.s32.totalorder %s144, %s146
      %p150 = scmp.eq.s32.totalorder %s28, 0
      %p151 = por %p149, %p150
      %p152 = scmp.ne.s32.totalorder %s144, %s146
      %p153 = scmp.eq.s32.totalorder %s33, 1
      %p154 = por %p152, %p153
      %p155 = scmp.ne.s32.totalorder %s146, %s147
      %p156 = scmp.eq.s32.totalorder %s33, 0
      %p157 = por %p155, %p156
      %p158 = scmp.ne.s32.totalorder %s146, %s147
      %p159 = scmp.eq.s32.totalorder %s34, 1
      %p160 = por %p158, %p159
      %p162 = scmp.ne.s32.totalorder %s147, %s161
      %p163 = scmp.eq.s32.totalorder %s34, 0
      %p164 = por %p162, %p163
      %s166 = sadd.s32 %s165, 1
      %p169 = scmp.eq.s32.totalorder %s28, 1
      %p170 = scmp.ne.s32.totalorder %s165, %s167
      %p171 = scmp.eq.s32.totalorder %s28, 0
      %p172 = por %p170, %p171
      %p173 = scmp.ne.s32.totalorder %s165, %s167
      %p174 = scmp.eq.s32.totalorder %s33, 1
      %p175 = por %p173, %p174
      %p176 = scmp.ne.s32.totalorder %s167, %s168
      %p177 = scmp.eq.s32.totalorder %s33, 0
      %p178 = por %p176, %p177
      %p179 = scmp.ne.s32.totalorder %s167, %s168
      %p180 = scmp.eq.s32.totalorder %s34, 1
      %p181 = por %p179, %p180
      %p183 = scmp.ne.s32.totalorder %s168, %s182
      %p184 = scmp.eq.s32.totalorder %s34, 0
      %p185 = por %p183, %p184
      %s187 = sadd.s32 %s186, 1
      %p190 = scmp.eq.s32.totalorder %s28, 1
      %p191 = scmp.ne.s32.totalorder %s186, %s188
      %p192 = scmp.eq.s32.totalorder %s28, 0
      %p193 = por %p191, %p192
      %p194 = scmp.ne.s32.totalorder %s186, %s188
      %p195 = scmp.eq.s32.totalorder %s33, 1
      %p196 = por %p194, %p195
      %p197 = scmp.ne.s32.totalorder %s188, %s189
      %p198 = scmp.eq.s32.totalorder %s33, 0
      %p199 = por %p197, %p198
      %p200 = scmp.ne.s32.totalorder %s188, %s189
      %p201 = scmp.eq.s32.totalorder %s34, 1
      %p202 = por %p200, %p201
      %p204 = scmp.ne.s32.totalorder %s189, %s203
      %p205 = scmp.eq.s32.totalorder %s34, 0
      %p206 = por %p204, %p205
      %s207 = ssub.s32 %s36, %s43
      %s208 = ssub.s32 %s35, %s47
      %s209 = sor.u32 %s207, %s208
      %p210 = scmp.eq.s32.totalorder %s209, 0
      %s212 = sadd.s32 %s211, 1
      %s213 = scalar_select %p210, %s211, %s212
      %p216 = pneg %p210
      %p217 = scmp.eq.s32.totalorder %s28, 1
      %p218 = por %p216, %p217
      %p219 = scmp.ne.s32.totalorder %s211, %s214
      %p220 = scmp.eq.s32.totalorder %s28, 0
      %p221 = por %p219, %p220
      %p222 = scmp.ne.s32.totalorder %s211, %s214
      %p223 = scmp.eq.s32.totalorder %s33, 1
      %p224 = por %p222, %p223
      %p225 = scmp.ne.s32.totalorder %s214, %s215
      %p226 = scmp.eq.s32.totalorder %s33, 0
      %p227 = por %p225, %p226
      %p228 = scmp.ne.s32.totalorder %s214, %s215
      %p229 = scmp.eq.s32.totalorder %s34, 1
      %p230 = por %p228, %p229
      %p232 = scmp.ne.s32.totalorder %s215, %s231
      %p233 = scmp.eq.s32.totalorder %s34, 0
      %p234 = por %p232, %p233
      %s235 = ssub.s32 %s35, %s47
      %p236 = scmp.eq.s32.totalorder %s235, 0
      %s238 = sadd.s32 %s237, 1
      %s239 = scalar_select %p236, %s237, %s238
      %p242 = pneg %p236
      %p243 = scmp.eq.s32.totalorder %s28, 1
      %p244 = por %p242, %p243
      %p245 = scmp.ne.s32.totalorder %s237, %s240
      %p246 = scmp.eq.s32.totalorder %s28, 0
      %p247 = por %p245, %p246
      %p248 = scmp.ne.s32.totalorder %s237, %s240
      %p249 = scmp.eq.s32.totalorder %s33, 1
      %p250 = por %p248, %p249
      %p251 = scmp.ne.s32.totalorder %s240, %s241
      %p252 = scmp.eq.s32.totalorder %s33, 0
      %p253 = por %p251, %p252
      %p254 = scmp.ne.s32.totalorder %s240, %s241
      %p255 = scmp.eq.s32.totalorder %s34, 1
      %p256 = por %p254, %p255
      %p258 = scmp.ne.s32.totalorder %s241, %s257
      %p259 = scmp.eq.s32.totalorder %s34, 0
      %p260 = por %p258, %p259
      %p261 = scmp.le.s32.totalorder 1, %s28
      %p262 = scmp.lt.s32.totalorder %s28, 3
      %p263 = pnand %p261, %p262
      %p264 = pneg %p263
      // Predicated region
      $region9: #{tpu_custom_call.1} parent=5 // pred_check
        _
      $region10: #{tpu_custom_call.1} parent=5 // pred_check_branch
        %266 = sbr.rel (%p263) target = $region12
      $region11: #{tpu_custom_call.1} parent=5 // pred_region
        %s267 = ssub.s32 %s28, 1
        // Predicated region
        $region13: #{tpu_custom_call.1} parent=11 // pred_check
          %p268 = pneg %p115
        $region14: #{tpu_custom_call.1} parent=11 // pred_check_branch
          %270 = sbr.rel (%p268) target = $region16
        $region15: #{tpu_custom_call.1} parent=11 // pred_region
          %s272 = ssub.s32 256, 256
          %273 = vsyncadd [#allocation6], %s272
          %s274 = sshll.u32 [#allocation7], 4
          %s275 = int_to_ptr.vmem [resolvable:$true] %s274
          %280 = dma.hbm_to_vmem [thread:$0]  %s2, 256, %s275, [#allocation6], 128, 128, 8
        $region16: #{tpu_custom_call.1} parent=11 // pred_fallthru
          _
        // Predicated region
        $region17: #{tpu_custom_call.1} parent=11 // pred_check
          %p281 = pneg %p136
        $region18: #{tpu_custom_call.1} parent=11 // pred_check_branch
          %283 = sbr.rel (%p281) target = $region20
        $region19: #{tpu_custom_call.1} parent=11 // pred_region
          %s285 = ssub.s32 512, 512
          %286 = vsyncadd [#allocation9], %s285
          %s287 = sshll.u32 [#allocation8], 4
          %s288 = int_to_ptr.vmem [resolvable:$true] %s287
          %293 = dma.hbm_to_vmem [thread:$0]  %s3, 512, %s288, [#allocation9], 128, 128, 8
        $region20: #{tpu_custom_call.1} parent=11 // pred_fallthru
          _
        // Predicated region
        $region21: #{tpu_custom_call.1} parent=11 // pred_check
          %p294 = pneg %p157
        $region22: #{tpu_custom_call.1} parent=11 // pred_check_branch
          %296 = sbr.rel (%p294) target = $region24
        $region23: #{tpu_custom_call.1} parent=11 // pred_region
          _
        $region24: #{tpu_custom_call.1} parent=11 // pred_fallthru
          _
        // Predicated region
        $region25: #{tpu_custom_call.1} parent=11 // pred_check
          %p297 = pneg %p178
        $region26: #{tpu_custom_call.1} parent=11 // pred_check_branch
          %299 = sbr.rel (%p297) target = $region28
        $region27: #{tpu_custom_call.1} parent=11 // pred_region
          %s301 = ssub.s32 512, 512
          %302 = vsyncadd [#allocation9], %s301
          %s303 = sshll.u32 [#allocation10], 4
          %s304 = int_to_ptr.vmem [resolvable:$true] %s303
          %309 = dma.hbm_to_vmem [thread:$0]  %s5, 512, %s304, [#allocation9], 128, 128, 8
        $region28: #{tpu_custom_call.1} parent=11 // pred_fallthru
          _
        // Predicated region
        $region29: #{tpu_custom_call.1} parent=11 // pred_check
          %p310 = pneg %p199
        $region30: #{tpu_custom_call.1} parent=11 // pred_check_branch
          %312 = sbr.rel (%p310) target = $region32
        $region31: #{tpu_custom_call.1} parent=11 // pred_region
          _
        $region32: #{tpu_custom_call.1} parent=11 // pred_fallthru
          _
      $region12: #{tpu_custom_call.1} parent=5 // pred_fallthru
        _
      %p313 = scmp.lt.s32.totalorder %s28, 2
      // Predicated region
      $region33: #{tpu_custom_call.1} parent=5 // pred_check
        %p314 = pneg %p313
      $region34: #{tpu_custom_call.1} parent=5 // pred_check_branch
        %316 = sbr.rel (%p314) target = $region36
      $region35: #{tpu_custom_call.1} parent=5 // pred_region
        // Predicated region
        $region37: #{tpu_custom_call.1} parent=35 // pred_check
          %p317 = pneg %p62
        $region38: #{tpu_custom_call.1} parent=35 // pred_check_branch
          %319 = sbr.rel (%p317) target = $region40
        $region39: #{tpu_custom_call.1} parent=35 // pred_region
          %s320 = sand.u32 %s52, 1
          %s321 = scalar_lea.sflag [#allocation3], %s320
          %s322 = sand.u32 %s52, 1
          %s323 = smul.addr %s322, 64
          %s324 = scalar_lea.vmem [#allocation2], %s323
          %s325 = smul.u32 8, %s36
          %s327 = ssub.s32 1024, 1024
          %328 = vsyncadd %s321, %s327
          %s329 = smul.addr %s325, 2
          %s330 = sadd.s32 %s35, %s329
          %s331 = smul.addr %s330, 128
          %s332 = scalar_lea.hbm %s0, %s331
          %s333 = sshll.u32 %s324, 4
          %s334 = int_to_ptr.vmem [resolvable:$true] %s333
          %339 = dma.hbm_to_vmem [thread:$0]  %s332, 1024, %s334, %s321, 256, 128, 8
        $region40: #{tpu_custom_call.1} parent=35 // pred_fallthru
          _
        // Predicated region
        $region41: #{tpu_custom_call.1} parent=35 // pred_check
          %p340 = pneg %p88
        $region42: #{tpu_custom_call.1} parent=35 // pred_check_branch
          %342 = sbr.rel (%p340) target = $region44
        $region43: #{tpu_custom_call.1} parent=35 // pred_region
          %s343 = sand.u32 %s28, 1
          %s344 = scalar_lea.sflag [#allocation6], %s343
          %s345 = sand.u32 %s78, 1
          %s346 = smul.addr %s345, 8
          %s347 = scalar_lea.vmem [#allocation5], %s346
          %s349 = ssub.s32 128, 128
          %350 = vsyncadd %s344, %s349
          %s351 = smul.addr %s35, 128
          %s352 = scalar_lea.hbm %s1, %s351
          %s354 = sshll.u32 %s347, 4
          %s355 = int_to_ptr.vmem [resolvable:$true] %s354
          %357 = dma.hbm_to_vmem [thread:$0]  %s352, 128, %s355, %s344
        $region44: #{tpu_custom_call.1} parent=35 // pred_fallthru
          _
      $region36: #{tpu_custom_call.1} parent=5 // pred_fallthru
        _
      %p358 = scmp.le.s32.totalorder 1, %s28
      %p359 = scmp.lt.s32.totalorder %s28, 3
      %p360 = pnand %p358, %p359
      %p361 = pneg %p360
      // Predicated region
      $region45: #{tpu_custom_call.1} parent=5 // pred_check
        _
      $region46: #{tpu_custom_call.1} parent=5 // pred_check_branch
        %363 = sbr.rel (%p360) target = $region48
      $region47: #{tpu_custom_call.1} parent=5 // pred_region
        %s364 = ssub.s32 %s28, 1
        %s365 = sand.u32 %s55, 1
        %s366 = scalar_lea.sflag [#allocation3], %s365
        %s367 = sand.u32 %s55, 1
        %s368 = smul.addr %s367, 64
        %s369 = scalar_lea.vmem [#allocation2], %s368
        // Predicated region
        $region49: #{tpu_custom_call.1} parent=47 // pred_check
          %p370 = pneg %p68
        $region50: #{tpu_custom_call.1} parent=47 // pred_check_branch
          %372 = sbr.rel (%p370) target = $region52
        $region51: #{tpu_custom_call.1} parent=47 // pred_region
          %373 = dma.done %s366, 1024
        $region52: #{tpu_custom_call.1} parent=47 // pred_fallthru
          _
        %s374 = sand.u32 %s33, 1
        %s375 = scalar_lea.sflag [#allocation6], %s374
        %s376 = sand.u32 %s81, 1
        %s377 = smul.addr %s376, 8
        %s378 = scalar_lea.vmem [#allocation5], %s377
        // Predicated region
        $region53: #{tpu_custom_call.1} parent=47 // pred_check
          %p379 = pneg %p94
        $region54: #{tpu_custom_call.1} parent=47 // pred_check_branch
          %381 = sbr.rel (%p379) target = $region56
        $region55: #{tpu_custom_call.1} parent=47 // pred_region
          %382 = dma.done %s375, 128
        $region56: #{tpu_custom_call.1} parent=47 // pred_fallthru
          _
        // Predicated region
        $region57: #{tpu_custom_call.1} parent=47 // pred_check
          %p383 = pneg %p115
        $region58: #{tpu_custom_call.1} parent=47 // pred_check_branch
          %385 = sbr.rel (%p383) target = $region60
        $region59: #{tpu_custom_call.1} parent=47 // pred_region
          %386 = dma.done [#allocation6], 256
        $region60: #{tpu_custom_call.1} parent=47 // pred_fallthru
          _
        // Predicated region
        $region61: #{tpu_custom_call.1} parent=47 // pred_check
          %p387 = pneg %p136
        $region62: #{tpu_custom_call.1} parent=47 // pred_check_branch
          %389 = sbr.rel (%p387) target = $region64
        $region63: #{tpu_custom_call.1} parent=47 // pred_region
          %390 = dma.done [#allocation9], 512
        $region64: #{tpu_custom_call.1} parent=47 // pred_fallthru
          _
        // Predicated region
        $region65: #{tpu_custom_call.1} parent=47 // pred_check
          %p391 = pneg %p178
        $region66: #{tpu_custom_call.1} parent=47 // pred_check_branch
          %393 = sbr.rel (%p391) target = $region68
        $region67: #{tpu_custom_call.1} parent=47 // pred_region
          %394 = dma.done [#allocation9], 512
        $region68: #{tpu_custom_call.1} parent=47 // pred_fallthru
          _
        %s395 = sand.u32 %s55, 1
        %s396 = scalar_lea.sflag [#allocation3], %s395
        %s397 = sand.u32 %s55, 1
        %s398 = smul.addr %s397, 64
        %s399 = scalar_lea.vmem [#allocation2], %s398
        %p400 = pneg %p68
        %p401 = pneg %p65
        %s402 = sand.u32 %s33, 1
        %s403 = scalar_lea.sflag [#allocation6], %s402
        %s404 = sand.u32 %s81, 1
        %s405 = smul.addr %s404, 8
        %s406 = scalar_lea.vmem [#allocation5], %s405
        %p407 = pneg %p94
        %p408 = pneg %p91
        %p409 = pneg %p115
        %p410 = pneg %p112
        %p411 = pneg %p136
        %p412 = pneg %p133
        %p413 = pneg %p157
        %p414 = pneg %p154
        %p415 = pneg %p178
        %p416 = pneg %p175
        %p417 = pneg %p199
        %p418 = pneg %p196
        %p419 = pneg %p227
        %p420 = pneg %p224
        %s421 = sand.u32 %s214, 1
        %s422 = scalar_lea.sflag [#allocation4], %s421
        %s423 = sand.u32 %s214, 1
        %s424 = smul.addr %s423, 8
        %s425 = scalar_lea.vmem [#allocation11], %s424
        %p426 = pneg %p253
        %p427 = pneg %p250
        %s428 = sand.u32 %s240, 1
        %s429 = scalar_lea.sflag [#allocation13], %s428
        %s430 = sand.u32 %s240, 1
        %s431 = smul.addr %s430, 8
        %s432 = scalar_lea.vmem [#allocation12], %s431
        %s433 = smul.u32 8, %s38
        %p434 = scmp.eq.s32.totalorder %s38, 0
        // Predicated region
        $region69: #{tpu_custom_call.1} parent=47 // pred_check
          %p435 = pneg %p434
        $region70: #{tpu_custom_call.1} parent=47 // pred_check_branch
          %437 = sbr.rel (%p435) target = $region72
        $region71: #{tpu_custom_call.1} parent=47 // pred_region
          %v438 = vld [vmem:[%s378] sm:$0xff]
          %vm439 = vcmask 261120
          %440 = vst.msk [vmem:[%s432] sm:$0xff] %vm439, %v438
        $region72: #{tpu_custom_call.1} parent=47 // pred_fallthru
          _
        %v441 = vld [vmem:[#allocation7] sm:$0xff]
        %v442 = vld [vmem:[#allocation7 + $0x8] sm:$0xff]
        %v443 = vld [vmem:[#allocation8] sm:$0xff]
        %v444 = vld [vmem:[#allocation8 + $0x8] sm:$0xff]
        %v445 = vld [vmem:[#allocation8 + $0x10] sm:$0xff]
        %v446 = vld [vmem:[#allocation8 + $0x18] sm:$0xff]
        %v447 = vld [vmem:[%s4] sm:$0x1]
        %v448 = vld [vmem:[#allocation10] sm:$0xff]
        %v449 = vld [vmem:[#allocation10 + $0x8] sm:$0xff]
        %v450 = vld [vmem:[#allocation10 + $0x10] sm:$0xff]
        %v451 = vld [vmem:[#allocation10 + $0x18] sm:$0xff]
        %v452 = vld [vmem:[%s6] sm:$0x1]
        %v453 = vld [vmem:[%s432] sm:$0xff]
        %v454 = vld [vmem:[%s369] sm:$0xff]
        %vm455 = vcmask 261120
        %v457 = vsel %vm455, %v453, 0
        %459 = vmatprep.subr.mxu0 0.0
        %460 = vmatpush1.msra.mxu0 0.0
        %461 = vmatprep.subr.mxu0 0.0
        %462 = vmatpush1.msra.mxu0 0.0
        %463 = vmatprep.subr.mxu0 0.0
        %464 = vmatpush1.msra.mxu0 0.0
        %465 = vmatprep.subr.mxu0 0.0
        %466 = vmatpush1.msra.mxu0 0.0
        %467 = vmatprep.subr.mxu0 0.0
        %468 = vmatpush1.msra.mxu0 0.0
        %469 = vmatprep.subr.mxu0 0.0
        %470 = vmatpush1.msra.mxu0 0.0
        %471 = vmatprep.subr.mxu0 0.0
        %472 = vmatpush1.msra.mxu0 0.0
        %473 = vmatprep.subr.mxu0 0.0
        %474 = vmatpush1.msra.mxu0 0.0
        %475 = vmatprep.subr.mxu0 0.0
        %476 = vmatpush1.msra.mxu0 0.0
        %477 = vmatprep.subr.mxu0 0.0
        %478 = vmatpush1.msra.mxu0 0.0
        %479 = vmatprep.subr.mxu0 0.0
        %480 = vmatpush1.msra.mxu0 0.0
        %481 = vmatprep.subr.mxu0 0.0
        %482 = vmatpush1.msra.mxu0 0.0
        %483 = vmatprep.subr.mxu0 0.0
        %484 = vmatpush1.msra.mxu0 %v446
        %485 = vmatprep.subr.mxu0 0.0
        %486 = vmatpush1.msra.mxu0 %v445
        %487 = vmatprep.subr.mxu0 0.0
        %488 = vmatpush1.msra.mxu0 %v444
        %489 = vmatprep.subr.mxu0 0.0
        %490 = vmatpush1.msra.mxu0 %v443
        %491 = vmatprep.subr.mxu0 0.0
        %492 = vmatpush2.msra.mxu0 0.0
        %493 = vmatprep.subr.mxu0 0.0
        %494 = vmatpush2.msra.mxu0 0.0
        %495 = vmatprep.subr.mxu0 0.0
        %496 = vmatpush2.msra.mxu0 0.0
        %497 = vmatprep.subr.mxu0 0.0
        %498 = vmatpush2.msra.mxu0 0.0
        %499 = vmatprep.subr.mxu0 0.0
        %500 = vmatpush2.msra.mxu0 0.0
        %501 = vmatprep.subr.mxu0 0.0
        %502 = vmatpush2.msra.mxu0 0.0
        %503 = vmatprep.subr.mxu0 0.0
        %504 = vmatpush2.msra.mxu0 0.0
        %505 = vmatprep.subr.mxu0 0.0
        %506 = vmatpush2.msra.mxu0 0.0
        %507 = vmatprep.subr.mxu0 0.0
        %508 = vmatpush2.msra.mxu0 0.0
        %509 = vmatprep.subr.mxu0 0.0
        %510 = vmatpush2.msra.mxu0 0.0
        %511 = vmatprep.subr.mxu0 0.0
        %512 = vmatpush2.msra.mxu0 0.0
        %513 = vmatprep.subr.mxu0 0.0
        %514 = vmatpush2.msra.mxu0 0.0
        %515 = vmatprep.subr.mxu0 0.0
        %516 = vmatpush2.msra.mxu0 0.0
        %517 = vmatprep.subr.mxu0 0.0
        %518 = vmatpush2.msra.mxu0 0.0
        %519 = vmatprep.subr.mxu0 0.0
        %520 = vmatpush2.msra.mxu0 0.0
        %521 = vmatprep.subr.mxu0 0.0
        %522 = vmatpush2.msra.mxu0 0.0
        %523 = vmatprep.mubr.f32.mxu0 0.0
        %524 = vmatmul.mubr.f32.gmra.mxu0 %v457
        %v525 = vpop.f32.mrf.mxu0
        %v526 = vadd.f32 0.0, %v525
        %v527 = vpop.f32.mrf.mxu0
        %528 = vdwg.mxu0
        %vm529 = vcmask 130048
        %v531 = vsel %vm529, %v454, 0
        %533 = vmatprep.subr.mxu0 0.0
        %534 = vmatpush1.msra.mxu0 0.0
        %535 = vmatprep.subr.mxu0 0.0
        %536 = vmatpush1.msra.mxu0 0.0
        %537 = vmatprep.subr.mxu0 0.0
        %538 = vmatpush1.msra.mxu0 0.0
        %539 = vmatprep.subr.mxu0 0.0
        %540 = vmatpush1.msra.mxu0 0.0
        %541 = vmatprep.subr.mxu0 0.0
        %542 = vmatpush1.msra.mxu0 0.0
        %543 = vmatprep.subr.mxu0 0.0
        %544 = vmatpush1.msra.mxu0 0.0
        %545 = vmatprep.subr.mxu0 0.0
        %546 = vmatpush1.msra.mxu0 0.0
        %547 = vmatprep.subr.mxu0 0.0
        %548 = vmatpush1.msra.mxu0 0.0
        %549 = vmatprep.subr.mxu0 0.0
        %550 = vmatpush1.msra.mxu0 0.0
        %551 = vmatprep.subr.mxu0 0.0
        %552 = vmatpush1.msra.mxu0 0.0
        %553 = vmatprep.subr.mxu0 0.0
        %554 = vmatpush1.msra.mxu0 0.0
        %555 = vmatprep.subr.mxu0 0.0
        %556 = vmatpush1.msra.mxu0 0.0
        %557 = vmatprep.subr.mxu0 0.0
        %558 = vmatpush1.msra.mxu0 0.0
        %559 = vmatprep.subr.mxu0 0.0
        %560 = vmatpush1.msra.mxu0 0.0
        %561 = vmatprep.subr.mxu0 0.0
        %562 = vmatpush1.msra.mxu0 %v442
        %563 = vmatprep.subr.mxu0 0.0
        %564 = vmatpush1.msra.mxu0 %v441
        %565 = vmatprep.subr.mxu0 0.0
        %566 = vmatpush2.msra.mxu0 0.0
        %567 = vmatprep.subr.mxu0 0.0
        %568 = vmatpush2.msra.mxu0 0.0
        %569 = vmatprep.subr.mxu0 0.0
        %570 = vmatpush2.msra.mxu0 0.0
        %571 = vmatprep.subr.mxu0 0.0
        %572 = vmatpush2.msra.mxu0 0.0
        %573 = vmatprep.subr.mxu0 0.0
        %574 = vmatpush2.msra.mxu0 0.0
        %575 = vmatprep.subr.mxu0 0.0
        %576 = vmatpush2.msra.mxu0 0.0
        %577 = vmatprep.subr.mxu0 0.0
        %578 = vmatpush2.msra.mxu0 0.0
        %579 = vmatprep.subr.mxu0 0.0
        %580 = vmatpush2.msra.mxu0 0.0
        %581 = vmatprep.subr.mxu0 0.0
        %582 = vmatpush2.msra.mxu0 0.0
        %583 = vmatprep.subr.mxu0 0.0
        %584 = vmatpush2.msra.mxu0 0.0
        %585 = vmatprep.subr.mxu0 0.0
        %586 = vmatpush2.msra.mxu0 0.0
        %587 = vmatprep.subr.mxu0 0.0
        %588 = vmatpush2.msra.mxu0 0.0
        %589 = vmatprep.subr.mxu0 0.0
        %590 = vmatpush2.msra.mxu0 0.0
        %591 = vmatprep.subr.mxu0 0.0
        %592 = vmatpush2.msra.mxu0 0.0
        %593 = vmatprep.subr.mxu0 0.0
        %594 = vmatpush2.msra.mxu0 0.0
        %595 = vmatprep.subr.mxu0 0.0
        %596 = vmatpush2.msra.mxu0 0.0
        %597 = vmatprep.mubr.f32.mxu0 0.0
        %598 = vmatmul.mubr.f32.gmra.mxu0 %v531
        %v599 = vpop.f32.mrf.mxu0
        %v600 = vadd.f32 %v526, %v599
        %v601 = vpop.f32.mrf.mxu0
        %602 = vdwg.mxu0
        %v604 = vlaneseq
        %v605 = vshrl.u32 %v604, 7
        %v606 = vsub.s32 0, %v605
        %v607 = vrot.slane %v447, %v606
        %v609 = vadd.f32 %v600, %v607
        %v610 = vmax.f32 %v609, 0.0
        %v612 = vlaneseq
        %v613 = vshrl.u32 %v612, 7
        %v614 = vsub.s32 0, %v613
        %v615 = vrot.slane %v452, %v614
        %v618 = vsel %vm455, %v610, 0
        %620 = vmatprep.subr.mxu0 0.0
        %621 = vmatpush1.msra.mxu0 0.0
        %622 = vmatprep.subr.mxu0 0.0
        %623 = vmatpush1.msra.mxu0 0.0
        %624 = vmatprep.subr.mxu0 0.0
        %625 = vmatpush1.msra.mxu0 0.0
        %626 = vmatprep.subr.mxu0 0.0
        %627 = vmatpush1.msra.mxu0 0.0
        %628 = vmatprep.subr.mxu0 0.0
        %629 = vmatpush1.msra.mxu0 0.0
        %630 = vmatprep.subr.mxu0 0.0
        %631 = vmatpush1.msra.mxu0 0.0
        %632 = vmatprep.subr.mxu0 0.0
        %633 = vmatpush1.msra.mxu0 0.0
        %634 = vmatprep.subr.mxu0 0.0
        %635 = vmatpush1.msra.mxu0 0.0
        %636 = vmatprep.subr.mxu0 0.0
        %637 = vmatpush1.msra.mxu0 0.0
        %638 = vmatprep.subr.mxu0 0.0
        %639 = vmatpush1.msra.mxu0 0.0
        %640 = vmatprep.subr.mxu0 0.0
        %641 = vmatpush1.msra.mxu0 0.0
        %642 = vmatprep.subr.mxu0 0.0
        %643 = vmatpush1.msra.mxu0 0.0
        %644 = vmatprep.subr.mxu0 0.0
        %645 = vmatpush1.msra.mxu0 %v451
        %646 = vmatprep.subr.mxu0 0.0
        %647 = vmatpush1.msra.mxu0 %v450
        %648 = vmatprep.subr.mxu0 0.0
        %649 = vmatpush1.msra.mxu0 %v449
        %650 = vmatprep.subr.mxu0 0.0
        %651 = vmatpush1.msra.mxu0 %v448
        %652 = vmatprep.subr.mxu0 0.0
        %653 = vmatpush2.msra.mxu0 0.0
        %654 = vmatprep.subr.mxu0 0.0
        %655 = vmatpush2.msra.mxu0 0.0
        %656 = vmatprep.subr.mxu0 0.0
        %657 = vmatpush2.msra.mxu0 0.0
        %658 = vmatprep.subr.mxu0 0.0
        %659 = vmatpush2.msra.mxu0 0.0
        %660 = vmatprep.subr.mxu0 0.0
        %661 = vmatpush2.msra.mxu0 0.0
        %662 = vmatprep.subr.mxu0 0.0
        %663 = vmatpush2.msra.mxu0 0.0
        %664 = vmatprep.subr.mxu0 0.0
        %665 = vmatpush2.msra.mxu0 0.0
        %666 = vmatprep.subr.mxu0 0.0
        %667 = vmatpush2.msra.mxu0 0.0
        %668 = vmatprep.subr.mxu0 0.0
        %669 = vmatpush2.msra.mxu0 0.0
        %670 = vmatprep.subr.mxu0 0.0
        %671 = vmatpush2.msra.mxu0 0.0
        %672 = vmatprep.subr.mxu0 0.0
        %673 = vmatpush2.msra.mxu0 0.0
        %674 = vmatprep.subr.mxu0 0.0
        %675 = vmatpush2.msra.mxu0 0.0
        %676 = vmatprep.subr.mxu0 0.0
        %677 = vmatpush2.msra.mxu0 0.0
        %678 = vmatprep.subr.mxu0 0.0
        %679 = vmatpush2.msra.mxu0 0.0
        %680 = vmatprep.subr.mxu0 0.0
        %681 = vmatpush2.msra.mxu0 0.0
        %682 = vmatprep.subr.mxu0 0.0
        %683 = vmatpush2.msra.mxu0 0.0
        %684 = vmatprep.mubr.f32.mxu0 0.0
        %685 = vmatmul.mubr.f32.gmra.mxu0 %v618
        %v686 = vpop.f32.mrf.mxu0
        %v687 = vadd.f32 %v615, %v686
        %v688 = vpop.f32.mrf.mxu0
        %689 = vdwg.mxu0
        %v690 = vtanh.pop %v687
        %s691 = scalar_lea.vmem %s369, 8 [#allocation2]
        %v692 = vld [vmem:[%s691] sm:$0xff]
        %694 = vrot.lane.b32.xlu0 %v687, 120
        %v695 = vpop.permute.xlu0 %694
        %v696 = vsel %vm455, %v695, 0
        %698 = vmatprep.subr.mxu0 0.0
        %699 = vmatpush1.msra.mxu0 0.0
        %700 = vmatprep.subr.mxu0 0.0
        %701 = vmatpush1.msra.mxu0 0.0
        %702 = vmatprep.subr.mxu0 0.0
        %703 = vmatpush1.msra.mxu0 0.0
        %704 = vmatprep.subr.mxu0 0.0
        %705 = vmatpush1.msra.mxu0 0.0
        %706 = vmatprep.subr.mxu0 0.0
        %707 = vmatpush1.msra.mxu0 0.0
        %708 = vmatprep.subr.mxu0 0.0
        %709 = vmatpush1.msra.mxu0 0.0
        %710 = vmatprep.subr.mxu0 0.0
        %711 = vmatpush1.msra.mxu0 0.0
        %712 = vmatprep.subr.mxu0 0.0
        %713 = vmatpush1.msra.mxu0 0.0
        %714 = vmatprep.subr.mxu0 0.0
        %715 = vmatpush1.msra.mxu0 0.0
        %716 = vmatprep.subr.mxu0 0.0
        %717 = vmatpush1.msra.mxu0 0.0
        %718 = vmatprep.subr.mxu0 0.0
        %719 = vmatpush1.msra.mxu0 0.0
        %720 = vmatprep.subr.mxu0 0.0
        %721 = vmatpush1.msra.mxu0 0.0
        %722 = vmatprep.subr.mxu0 0.0
        %723 = vmatpush1.msra.mxu0 %v446
        %724 = vmatprep.subr.mxu0 0.0
        %725 = vmatpush1.msra.mxu0 %v445
        %726 = vmatprep.subr.mxu0 0.0
        %727 = vmatpush1.msra.mxu0 %v444
        %728 = vmatprep.subr.mxu0 0.0
        %729 = vmatpush1.msra.mxu0 %v443
        %730 = vmatprep.subr.mxu0 0.0
        %731 = vmatpush2.msra.mxu0 0.0
        %732 = vmatprep.subr.mxu0 0.0
        %733 = vmatpush2.msra.mxu0 0.0
        %734 = vmatprep.subr.mxu0 0.0
        %735 = vmatpush2.msra.mxu0 0.0
        %736 = vmatprep.subr.mxu0 0.0
        %737 = vmatpush2.msra.mxu0 0.0
        %738 = vmatprep.subr.mxu0 0.0
        %739 = vmatpush2.msra.mxu0 0.0
        %740 = vmatprep.subr.mxu0 0.0
        %741 = vmatpush2.msra.mxu0 0.0
        %742 = vmatprep.subr.mxu0 0.0
        %743 = vmatpush2.msra.mxu0 0.0
        %744 = vmatprep.subr.mxu0 0.0
        %745 = vmatpush2.msra.mxu0 0.0
        %746 = vmatprep.subr.mxu0 0.0
        %747 = vmatpush2.msra.mxu0 0.0
        %748 = vmatprep.subr.mxu0 0.0
        %749 = vmatpush2.msra.mxu0 0.0
        %750 = vmatprep.subr.mxu0 0.0
        %751 = vmatpush2.msra.mxu0 0.0
        %752 = vmatprep.subr.mxu0 0.0
        %753 = vmatpush2.msra.mxu0 0.0
        %754 = vmatprep.subr.mxu0 0.0
        %755 = vmatpush2.msra.mxu0 0.0
        %756 = vmatprep.subr.mxu0 0.0
        %757 = vmatpush2.msra.mxu0 0.0
        %758 = vmatprep.subr.mxu0 0.0
        %759 = vmatpush2.msra.mxu0 0.0
        %760 = vmatprep.subr.mxu0 0.0
        %761 = vmatpush2.msra.mxu0 0.0
        %762 = vmatprep.mubr.f32.mxu0 0.0
        %763 = vmatmul.mubr.f32.gmra.mxu0 %v696
        %v764 = vpop.f32.mrf.mxu0
        %v765 = vadd.f32 0.0, %v764
        %v766 = vpop.f32.mrf.mxu0
        %767 = vdwg.mxu0
        %v769 = vsel %vm529, %v692, 0
        %771 = vmatprep.subr.mxu0 0.0
        %772 = vmatpush1.msra.mxu0 0.0
        %773 = vmatprep.subr.mxu0 0.0
        %774 = vmatpush1.msra.mxu0 0.0
        %775 = vmatprep.subr.mxu0 0.0
        %776 = vmatpush1.msra.mxu0 0.0
        %777 = vmatprep.subr.mxu0 0.0
        %778 = vmatpush1.msra.mxu0 0.0
        %779 = vmatprep.subr.mxu0 0.0
        %780 = vmatpush1.msra.mxu0 0.0
        %781 = vmatprep.subr.mxu0 0.0
        %782 = vmatpush1.msra.mxu0 0.0
        %783 = vmatprep.subr.mxu0 0.0
        %784 = vmatpush1.msra.mxu0 0.0
        %785 = vmatprep.subr.mxu0 0.0
        %786 = vmatpush1.msra.mxu0 0.0
        %787 = vmatprep.subr.mxu0 0.0
        %788 = vmatpush1.msra.mxu0 0.0
        %789 = vmatprep.subr.mxu0 0.0
        %790 = vmatpush1.msra.mxu0 0.0
        %791 = vmatprep.subr.mxu0 0.0
        %792 = vmatpush1.msra.mxu0 0.0
        %793 = vmatprep.subr.mxu0 0.0
        %794 = vmatpush1.msra.mxu0 0.0
        %795 = vmatprep.subr.mxu0 0.0
        %796 = vmatpush1.msra.mxu0 0.0
        %797 = vmatprep.subr.mxu0 0.0
        %798 = vmatpush1.msra.mxu0 0.0
        %799 = vmatprep.subr.mxu0 0.0
        %800 = vmatpush1.msra.mxu0 %v442
        %801 = vmatprep.subr.mxu0 0.0
        %802 = vmatpush1.msra.mxu0 %v441
        %803 = vmatprep.subr.mxu0 0.0
        %804 = vmatpush2.msra.mxu0 0.0
        %805 = vmatprep.subr.mxu0 0.0
        %806 = vmatpush2.msra.mxu0 0.0
        %807 = vmatprep.subr.mxu0 0.0
        %808 = vmatpush2.msra.mxu0 0.0
        %809 = vmatprep.subr.mxu0 0.0
        %810 = vmatpush2.msra.mxu0 0.0
        %811 = vmatprep.subr.mxu0 0.0
        %812 = vmatpush2.msra.mxu0 0.0
        %813 = vmatprep.subr.mxu0 0.0
        %814 = vmatpush2.msra.mxu0 0.0
        %815 = vmatprep.subr.mxu0 0.0
        %816 = vmatpush2.msra.mxu0 0.0
        %817 = vmatprep.subr.mxu0 0.0
        %818 = vmatpush2.msra.mxu0 0.0
        %819 = vmatprep.subr.mxu0 0.0
        %820 = vmatpush2.msra.mxu0 0.0
        %821 = vmatprep.subr.mxu0 0.0
        %822 = vmatpush2.msra.mxu0 0.0
        %823 = vmatprep.subr.mxu0 0.0
        %824 = vmatpush2.msra.mxu0 0.0
        %825 = vmatprep.subr.mxu0 0.0
        %826 = vmatpush2.msra.mxu0 0.0
        %827 = vmatprep.subr.mxu0 0.0
        %828 = vmatpush2.msra.mxu0 0.0
        %829 = vmatprep.subr.mxu0 0.0
        %830 = vmatpush2.msra.mxu0 0.0
        %831 = vmatprep.subr.mxu0 0.0
        %832 = vmatpush2.msra.mxu0 0.0
        %833 = vmatprep.subr.mxu0 0.0
        %834 = vmatpush2.msra.mxu0 0.0
        %835 = vmatprep.mubr.f32.mxu0 0.0
        %836 = vmatmul.mubr.f32.gmra.mxu0 %v769
        %v837 = vpop.f32.mrf.mxu0
        %v838 = vadd.f32 %v765, %v837
        %v839 = vpop.f32.mrf.mxu0
        %840 = vdwg.mxu0
        %v841 = vadd.f32 %v838, %v607
        %v842 = vmax.f32 %v841, 0.0
        %v844 = vsel %vm455, %v842, 0
        %846 = vmatprep.subr.mxu0 0.0
        %847 = vmatpush1.msra.mxu0 0.0
        %848 = vmatprep.subr.mxu0 0.0
        %849 = vmatpush1.msra.mxu0 0.0
        %850 = vmatprep.subr.mxu0 0.0
        %851 = vmatpush1.msra.mxu0 0.0
        %852 = vmatprep.subr.mxu0 0.0
        %853 = vmatpush1.msra.mxu0 0.0
        %854 = vmatprep.subr.mxu0 0.0
        %855 = vmatpush1.msra.mxu0 0.0
        %856 = vmatprep.subr.mxu0 0.0
        %857 = vmatpush1.msra.mxu0 0.0
        %858 = vmatprep.subr.mxu0 0.0
        %859 = vmatpush1.msra.mxu0 0.0
        %860 = vmatprep.subr.mxu0 0.0
        %861 = vmatpush1.msra.mxu0 0.0
        %862 = vmatprep.subr.mxu0 0.0
        %863 = vmatpush1.msra.mxu0 0.0
        %864 = vmatprep.subr.mxu0 0.0
        %865 = vmatpush1.msra.mxu0 0.0
        %866 = vmatprep.subr.mxu0 0.0
        %867 = vmatpush1.msra.mxu0 0.0
        %868 = vmatprep.subr.mxu0 0.0
        %869 = vmatpush1.msra.mxu0 0.0
        %870 = vmatprep.subr.mxu0 0.0
        %871 = vmatpush1.msra.mxu0 %v451
        %872 = vmatprep.subr.mxu0 0.0
        %873 = vmatpush1.msra.mxu0 %v450
        %874 = vmatprep.subr.mxu0 0.0
        %875 = vmatpush1.msra.mxu0 %v449
        %876 = vmatprep.subr.mxu0 0.0
        %877 = vmatpush1.msra.mxu0 %v448
        %878 = vmatprep.subr.mxu0 0.0
        %879 = vmatpush2.msra.mxu0 0.0
        %880 = vmatprep.subr.mxu0 0.0
        %881 = vmatpush2.msra.mxu0 0.0
        %882 = vmatprep.subr.mxu0 0.0
        %883 = vmatpush2.msra.mxu0 0.0
        %884 = vmatprep.subr.mxu0 0.0
        %885 = vmatpush2.msra.mxu0 0.0
        %886 = vmatprep.subr.mxu0 0.0
        %887 = vmatpush2.msra.mxu0 0.0
        %888 = vmatprep.subr.mxu0 0.0
        %889 = vmatpush2.msra.mxu0 0.0
        %890 = vmatprep.subr.mxu0 0.0
        %891 = vmatpush2.msra.mxu0 0.0
        %892 = vmatprep.subr.mxu0 0.0
        %893 = vmatpush2.msra.mxu0 0.0
        %894 = vmatprep.subr.mxu0 0.0
        %895 = vmatpush2.msra.mxu0 0.0
        %896 = vmatprep.subr.mxu0 0.0
        %897 = vmatpush2.msra.mxu0 0.0
        %898 = vmatprep.subr.mxu0 0.0
        %899 = vmatpush2.msra.mxu0 0.0
        %900 = vmatprep.subr.mxu0 0.0
        %901 = vmatpush2.msra.mxu0 0.0
        %902 = vmatprep.subr.mxu0 0.0
        %903 = vmatpush2.msra.mxu0 0.0
        %904 = vmatprep.subr.mxu0 0.0
        %905 = vmatpush2.msra.mxu0 0.0
        %906 = vmatprep.subr.mxu0 0.0
        %907 = vmatpush2.msra.mxu0 0.0
        %908 = vmatprep.subr.mxu0 0.0
        %909 = vmatpush2.msra.mxu0 0.0
        %910 = vmatprep.mubr.f32.mxu0 0.0
        %911 = vmatmul.mubr.f32.gmra.mxu0 %v844
        %v912 = vpop.f32.mrf.mxu0
        %v913 = vadd.f32 %v615, %v912
        %v914 = vpop.f32.mrf.mxu0
        %915 = vdwg.mxu0
        %v916 = vtanh.pop %v913
        %s917 = scalar_lea.vmem %s369, 16 [#allocation2]
        %v918 = vld [vmem:[%s917] sm:$0xff]
        %920 = vrot.lane.b32.xlu0 %v913, 120
        %v921 = vpop.permute.xlu0 %920
        %v922 = vsel %vm455, %v921, 0
        %924 = vmatprep.subr.mxu0 0.0
        %925 = vmatpush1.msra.mxu0 0.0
        %926 = vmatprep.subr.mxu0 0.0
        %927 = vmatpush1.msra.mxu0 0.0
        %928 = vmatprep.subr.mxu0 0.0
        %929 = vmatpush1.msra.mxu0 0.0
        %930 = vmatprep.subr.mxu0 0.0
        %931 = vmatpush1.msra.mxu0 0.0
        %932 = vmatprep.subr.mxu0 0.0
        %933 = vmatpush1.msra.mxu0 0.0
        %934 = vmatprep.subr.mxu0 0.0
        %935 = vmatpush1.msra.mxu0 0.0
        %936 = vmatprep.subr.mxu0 0.0
        %937 = vmatpush1.msra.mxu0 0.0
        %938 = vmatprep.subr.mxu0 0.0
        %939 = vmatpush1.msra.mxu0 0.0
        %940 = vmatprep.subr.mxu0 0.0
        %941 = vmatpush1.msra.mxu0 0.0
        %942 = vmatprep.subr.mxu0 0.0
        %943 = vmatpush1.msra.mxu0 0.0
        %944 = vmatprep.subr.mxu0 0.0
        %945 = vmatpush1.msra.mxu0 0.0
        %946 = vmatprep.subr.mxu0 0.0
        %947 = vmatpush1.msra.mxu0 0.0
        %948 = vmatprep.subr.mxu0 0.0
        %949 = vmatpush1.msra.mxu0 %v446
        %950 = vmatprep.subr.mxu0 0.0
        %951 = vmatpush1.msra.mxu0 %v445
        %952 = vmatprep.subr.mxu0 0.0
        %953 = vmatpush1.msra.mxu0 %v444
        %954 = vmatprep.subr.mxu0 0.0
        %955 = vmatpush1.msra.mxu0 %v443
        %956 = vmatprep.subr.mxu0 0.0
        %957 = vmatpush2.msra.mxu0 0.0
        %958 = vmatprep.subr.mxu0 0.0
        %959 = vmatpush2.msra.mxu0 0.0
        %960 = vmatprep.subr.mxu0 0.0
        %961 = vmatpush2.msra.mxu0 0.0
        %962 = vmatprep.subr.mxu0 0.0
        %963 = vmatpush2.msra.mxu0 0.0
        %964 = vmatprep.subr.mxu0 0.0
        %965 = vmatpush2.msra.mxu0 0.0
        %966 = vmatprep.subr.mxu0 0.0
        %967 = vmatpush2.msra.mxu0 0.0
        %968 = vmatprep.subr.mxu0 0.0
        %969 = vmatpush2.msra.mxu0 0.0
        %970 = vmatprep.subr.mxu0 0.0
        %971 = vmatpush2.msra.mxu0 0.0
        %972 = vmatprep.subr.mxu0 0.0
        %973 = vmatpush2.msra.mxu0 0.0
        %974 = vmatprep.subr.mxu0 0.0
        %975 = vmatpush2.msra.mxu0 0.0
        %976 = vmatprep.subr.mxu0 0.0
        %977 = vmatpush2.msra.mxu0 0.0
        %978 = vmatprep.subr.mxu0 0.0
        %979 = vmatpush2.msra.mxu0 0.0
        %980 = vmatprep.subr.mxu0 0.0
        %981 = vmatpush2.msra.mxu0 0.0
        %982 = vmatprep.subr.mxu0 0.0
        %983 = vmatpush2.msra.mxu0 0.0
        %984 = vmatprep.subr.mxu0 0.0
        %985 = vmatpush2.msra.mxu0 0.0
        %986 = vmatprep.subr.mxu0 0.0
        %987 = vmatpush2.msra.mxu0 0.0
        %988 = vmatprep.mubr.f32.mxu0 0.0
        %989 = vmatmul.mubr.f32.gmra.mxu0 %v922
        %v990 = vpop.f32.mrf.mxu0
        %v991 = vadd.f32 0.0, %v990
        %v992 = vpop.f32.mrf.mxu0
        %993 = vdwg.mxu0
        %v995 = vsel %vm529, %v918, 0
        %997 = vmatprep.subr.mxu0 0.0
        %998 = vmatpush1.msra.mxu0 0.0
        %999 = vmatprep.subr.mxu0 0.0
        %1000 = vmatpush1.msra.mxu0 0.0
        %1001 = vmatprep.subr.mxu0 0.0
        %1002 = vmatpush1.msra.mxu0 0.0
        %1003 = vmatprep.subr.mxu0 0.0
        %1004 = vmatpush1.msra.mxu0 0.0
        %1005 = vmatprep.subr.mxu0 0.0
        %1006 = vmatpush1.msra.mxu0 0.0
        %1007 = vmatprep.subr.mxu0 0.0
        %1008 = vmatpush1.msra.mxu0 0.0
        %1009 = vmatprep.subr.mxu0 0.0
        %1010 = vmatpush1.msra.mxu0 0.0
        %1011 = vmatprep.subr.mxu0 0.0
        %1012 = vmatpush1.msra.mxu0 0.0
        %1013 = vmatprep.subr.mxu0 0.0
        %1014 = vmatpush1.msra.mxu0 0.0
        %1015 = vmatprep.subr.mxu0 0.0
        %1016 = vmatpush1.msra.mxu0 0.0
        %1017 = vmatprep.subr.mxu0 0.0
        %1018 = vmatpush1.msra.mxu0 0.0
        %1019 = vmatprep.subr.mxu0 0.0
        %1020 = vmatpush1.msra.mxu0 0.0
        %1021 = vmatprep.subr.mxu0 0.0
        %1022 = vmatpush1.msra.mxu0 0.0
        %1023 = vmatprep.subr.mxu0 0.0
        %1024 = vmatpush1.msra.mxu0 0.0
        %1025 = vmatprep.subr.mxu0 0.0
        %1026 = vmatpush1.msra.mxu0 %v442
        %1027 = vmatprep.subr.mxu0 0.0
        %1028 = vmatpush1.msra.mxu0 %v441
        %1029 = vmatprep.subr.mxu0 0.0
        %1030 = vmatpush2.msra.mxu0 0.0
        %1031 = vmatprep.subr.mxu0 0.0
        %1032 = vmatpush2.msra.mxu0 0.0
        %1033 = vmatprep.subr.mxu0 0.0
        %1034 = vmatpush2.msra.mxu0 0.0
        %1035 = vmatprep.subr.mxu0 0.0
        %1036 = vmatpush2.msra.mxu0 0.0
        %1037 = vmatprep.subr.mxu0 0.0
        %1038 = vmatpush2.msra.mxu0 0.0
        %1039 = vmatprep.subr.mxu0 0.0
        %1040 = vmatpush2.msra.mxu0 0.0
        %1041 = vmatprep.subr.mxu0 0.0
        %1042 = vmatpush2.msra.mxu0 0.0
        %1043 = vmatprep.subr.mxu0 0.0
        %1044 = vmatpush2.msra.mxu0 0.0
        %1045 = vmatprep.subr.mxu0 0.0
        %1046 = vmatpush2.msra.mxu0 0.0
        %1047 = vmatprep.subr.mxu0 0.0
        %1048 = vmatpush2.msra.mxu0 0.0
        %1049 = vmatprep.subr.mxu0 0.0
        %1050 = vmatpush2.msra.mxu0 0.0
        %1051 = vmatprep.subr.mxu0 0.0
        %1052 = vmatpush2.msra.mxu0 0.0
        %1053 = vmatprep.subr.mxu0 0.0
        %1054 = vmatpush2.msra.mxu0 0.0
        %1055 = vmatprep.subr.mxu0 0.0
        %1056 = vmatpush2.msra.mxu0 0.0
        %1057 = vmatprep.subr.mxu0 0.0
        %1058 = vmatpush2.msra.mxu0 0.0
        %1059 = vmatprep.subr.mxu0 0.0
        %1060 = vmatpush2.msra.mxu0 0.0
        %1061 = vmatprep.mubr.f32.mxu0 0.0
        %1062 = vmatmul.mubr.f32.gmra.mxu0 %v995
        %v1063 = vpop.f32.mrf.mxu0
        %v1064 = vadd.f32 %v991, %v1063
        %v1065 = vpop.f32.mrf.mxu0
        %1066 = vdwg.mxu0
        %v1067 = vadd.f32 %v1064, %v607
        %v1068 = vmax.f32 %v1067, 0.0
        %v1070 = vsel %vm455, %v1068, 0
        %1072 = vmatprep.subr.mxu0 0.0
        %1073 = vmatpush1.msra.mxu0 0.0
        %1074 = vmatprep.subr.mxu0 0.0
        %1075 = vmatpush1.msra.mxu0 0.0
        %1076 = vmatprep.subr.mxu0 0.0
        %1077 = vmatpush1.msra.mxu0 0.0
        %1078 = vmatprep.subr.mxu0 0.0
        %1079 = vmatpush1.msra.mxu0 0.0
        %1080 = vmatprep.subr.mxu0 0.0
        %1081 = vmatpush1.msra.mxu0 0.0
        %1082 = vmatprep.subr.mxu0 0.0
        %1083 = vmatpush1.msra.mxu0 0.0
        %1084 = vmatprep.subr.mxu0 0.0
        %1085 = vmatpush1.msra.mxu0 0.0
        %1086 = vmatprep.subr.mxu0 0.0
        %1087 = vmatpush1.msra.mxu0 0.0
        %1088 = vmatprep.subr.mxu0 0.0
        %1089 = vmatpush1.msra.mxu0 0.0
        %1090 = vmatprep.subr.mxu0 0.0
        %1091 = vmatpush1.msra.mxu0 0.0
        %1092 = vmatprep.subr.mxu0 0.0
        %1093 = vmatpush1.msra.mxu0 0.0
        %1094 = vmatprep.subr.mxu0 0.0
        %1095 = vmatpush1.msra.mxu0 0.0
        %1096 = vmatprep.subr.mxu0 0.0
        %1097 = vmatpush1.msra.mxu0 %v451
        %1098 = vmatprep.subr.mxu0 0.0
        %1099 = vmatpush1.msra.mxu0 %v450
        %1100 = vmatprep.subr.mxu0 0.0
        %1101 = vmatpush1.msra.mxu0 %v449
        %1102 = vmatprep.subr.mxu0 0.0
        %1103 = vmatpush1.msra.mxu0 %v448
        %1104 = vmatprep.subr.mxu0 0.0
        %1105 = vmatpush2.msra.mxu0 0.0
        %1106 = vmatprep.subr.mxu0 0.0
        %1107 = vmatpush2.msra.mxu0 0.0
        %1108 = vmatprep.subr.mxu0 0.0
        %1109 = vmatpush2.msra.mxu0 0.0
        %1110 = vmatprep.subr.mxu0 0.0
        %1111 = vmatpush2.msra.mxu0 0.0
        %1112 = vmatprep.subr.mxu0 0.0
        %1113 = vmatpush2.msra.mxu0 0.0
        %1114 = vmatprep.subr.mxu0 0.0
        %1115 = vmatpush2.msra.mxu0 0.0
        %1116 = vmatprep.subr.mxu0 0.0
        %1117 = vmatpush2.msra.mxu0 0.0
        %1118 = vmatprep.subr.mxu0 0.0
        %1119 = vmatpush2.msra.mxu0 0.0
        %1120 = vmatprep.subr.mxu0 0.0
        %1121 = vmatpush2.msra.mxu0 0.0
        %1122 = vmatprep.subr.mxu0 0.0
        %1123 = vmatpush2.msra.mxu0 0.0
        %1124 = vmatprep.subr.mxu0 0.0
        %1125 = vmatpush2.msra.mxu0 0.0
        %1126 = vmatprep.subr.mxu0 0.0
        %1127 = vmatpush2.msra.mxu0 0.0
        %1128 = vmatprep.subr.mxu0 0.0
        %1129 = vmatpush2.msra.mxu0 0.0
        %1130 = vmatprep.subr.mxu0 0.0
        %1131 = vmatpush2.msra.mxu0 0.0
        %1132 = vmatprep.subr.mxu0 0.0
        %1133 = vmatpush2.msra.mxu0 0.0
        %1134 = vmatprep.subr.mxu0 0.0
        %1135 = vmatpush2.msra.mxu0 0.0
        %1136 = vmatprep.mubr.f32.mxu0 0.0
        %1137 = vmatmul.mubr.f32.gmra.mxu0 %v1070
        %v1138 = vpop.f32.mrf.mxu0
        %v1139 = vadd.f32 %v615, %v1138
        %v1140 = vpop.f32.mrf.mxu0
        %1141 = vdwg.mxu0
        %v1142 = vtanh.pop %v1139
        %s1143 = scalar_lea.vmem %s369, 24 [#allocation2]
        %v1144 = vld [vmem:[%s1143] sm:$0xff]
        %1146 = vrot.lane.b32.xlu0 %v1139, 120
        %v1147 = vpop.permute.xlu0 %1146
        %v1148 = vsel %vm455, %v1147, 0
        %1150 = vmatprep.subr.mxu0 0.0
        %1151 = vmatpush1.msra.mxu0 0.0
        %1152 = vmatprep.subr.mxu0 0.0
        %1153 = vmatpush1.msra.mxu0 0.0
        %1154 = vmatprep.subr.mxu0 0.0
        %1155 = vmatpush1.msra.mxu0 0.0
        %1156 = vmatprep.subr.mxu0 0.0
        %1157 = vmatpush1.msra.mxu0 0.0
        %1158 = vmatprep.subr.mxu0 0.0
        %1159 = vmatpush1.msra.mxu0 0.0
        %1160 = vmatprep.subr.mxu0 0.0
        %1161 = vmatpush1.msra.mxu0 0.0
        %1162 = vmatprep.subr.mxu0 0.0
        %1163 = vmatpush1.msra.mxu0 0.0
        %1164 = vmatprep.subr.mxu0 0.0
        %1165 = vmatpush1.msra.mxu0 0.0
        %1166 = vmatprep.subr.mxu0 0.0
        %1167 = vmatpush1.msra.mxu0 0.0
        %1168 = vmatprep.subr.mxu0 0.0
        %1169 = vmatpush1.msra.mxu0 0.0
        %1170 = vmatprep.subr.mxu0 0.0
        %1171 = vmatpush1.msra.mxu0 0.0
        %1172 = vmatprep.subr.mxu0 0.0
        %1173 = vmatpush1.msra.mxu0 0.0
        %1174 = vmatprep.subr.mxu0 0.0
        %1175 = vmatpush1.msra.mxu0 %v446
        %1176 = vmatprep.subr.mxu0 0.0
        %1177 = vmatpush1.msra.mxu0 %v445
        %1178 = vmatprep.subr.mxu0 0.0
        %1179 = vmatpush1.msra.mxu0 %v444
        %1180 = vmatprep.subr.mxu0 0.0
        %1181 = vmatpush1.msra.mxu0 %v443
        %1182 = vmatprep.subr.mxu0 0.0
        %1183 = vmatpush2.msra.mxu0 0.0
        %1184 = vmatprep.subr.mxu0 0.0
        %1185 = vmatpush2.msra.mxu0 0.0
        %1186 = vmatprep.subr.mxu0 0.0
        %1187 = vmatpush2.msra.mxu0 0.0
        %1188 = vmatprep.subr.mxu0 0.0
        %1189 = vmatpush2.msra.mxu0 0.0
        %1190 = vmatprep.subr.mxu0 0.0
        %1191 = vmatpush2.msra.mxu0 0.0
        %1192 = vmatprep.subr.mxu0 0.0
        %1193 = vmatpush2.msra.mxu0 0.0
        %1194 = vmatprep.subr.mxu0 0.0
        %1195 = vmatpush2.msra.mxu0 0.0
        %1196 = vmatprep.subr.mxu0 0.0
        %1197 = vmatpush2.msra.mxu0 0.0
        %1198 = vmatprep.subr.mxu0 0.0
        %1199 = vmatpush2.msra.mxu0 0.0
        %1200 = vmatprep.subr.mxu0 0.0
        %1201 = vmatpush2.msra.mxu0 0.0
        %1202 = vmatprep.subr.mxu0 0.0
        %1203 = vmatpush2.msra.mxu0 0.0
        %1204 = vmatprep.subr.mxu0 0.0
        %1205 = vmatpush2.msra.mxu0 0.0
        %1206 = vmatprep.subr.mxu0 0.0
        %1207 = vmatpush2.msra.mxu0 0.0
        %1208 = vmatprep.subr.mxu0 0.0
        %1209 = vmatpush2.msra.mxu0 0.0
        %1210 = vmatprep.subr.mxu0 0.0
        %1211 = vmatpush2.msra.mxu0 0.0
        %1212 = vmatprep.subr.mxu0 0.0
        %1213 = vmatpush2.msra.mxu0 0.0
        %1214 = vmatprep.mubr.f32.mxu0 0.0
        %1215 = vmatmul.mubr.f32.gmra.mxu0 %v1148
        %v1216 = vpop.f32.mrf.mxu0
        %v1217 = vadd.f32 0.0, %v1216
        %v1218 = vpop.f32.mrf.mxu0
        %1219 = vdwg.mxu0
        %v1221 = vsel %vm529, %v1144, 0
        %1223 = vmatprep.subr.mxu0 0.0
        %1224 = vmatpush1.msra.mxu0 0.0
        %1225 = vmatprep.subr.mxu0 0.0
        %1226 = vmatpush1.msra.mxu0 0.0
        %1227 = vmatprep.subr.mxu0 0.0
        %1228 = vmatpush1.msra.mxu0 0.0
        %1229 = vmatprep.subr.mxu0 0.0
        %1230 = vmatpush1.msra.mxu0 0.0
        %1231 = vmatprep.subr.mxu0 0.0
        %1232 = vmatpush1.msra.mxu0 0.0
        %1233 = vmatprep.subr.mxu0 0.0
        %1234 = vmatpush1.msra.mxu0 0.0
        %1235 = vmatprep.subr.mxu0 0.0
        %1236 = vmatpush1.msra.mxu0 0.0
        %1237 = vmatprep.subr.mxu0 0.0
        %1238 = vmatpush1.msra.mxu0 0.0
        %1239 = vmatprep.subr.mxu0 0.0
        %1240 = vmatpush1.msra.mxu0 0.0
        %1241 = vmatprep.subr.mxu0 0.0
        %1242 = vmatpush1.msra.mxu0 0.0
        %1243 = vmatprep.subr.mxu0 0.0
        %1244 = vmatpush1.msra.mxu0 0.0
        %1245 = vmatprep.subr.mxu0 0.0
        %1246 = vmatpush1.msra.mxu0 0.0
        %1247 = vmatprep.subr.mxu0 0.0
        %1248 = vmatpush1.msra.mxu0 0.0
        %1249 = vmatprep.subr.mxu0 0.0
        %1250 = vmatpush1.msra.mxu0 0.0
        %1251 = vmatprep.subr.mxu0 0.0
        %1252 = vmatpush1.msra.mxu0 %v442
        %1253 = vmatprep.subr.mxu0 0.0
        %1254 = vmatpush1.msra.mxu0 %v441
        %1255 = vmatprep.subr.mxu0 0.0
        %1256 = vmatpush2.msra.mxu0 0.0
        %1257 = vmatprep.subr.mxu0 0.0
        %1258 = vmatpush2.msra.mxu0 0.0
        %1259 = vmatprep.subr.mxu0 0.0
        %1260 = vmatpush2.msra.mxu0 0.0
        %1261 = vmatprep.subr.mxu0 0.0
        %1262 = vmatpush2.msra.mxu0 0.0
        %1263 = vmatprep.subr.mxu0 0.0
        %1264 = vmatpush2.msra.mxu0 0.0
        %1265 = vmatprep.subr.mxu0 0.0
        %1266 = vmatpush2.msra.mxu0 0.0
        %1267 = vmatprep.subr.mxu0 0.0
        %1268 = vmatpush2.msra.mxu0 0.0
        %1269 = vmatprep.subr.mxu0 0.0
        %1270 = vmatpush2.msra.mxu0 0.0
        %1271 = vmatprep.subr.mxu0 0.0
        %1272 = vmatpush2.msra.mxu0 0.0
        %1273 = vmatprep.subr.mxu0 0.0
        %1274 = vmatpush2.msra.mxu0 0.0
        %1275 = vmatprep.subr.mxu0 0.0
        %1276 = vmatpush2.msra.mxu0 0.0
        %1277 = vmatprep.subr.mxu0 0.0
        %1278 = vmatpush2.msra.mxu0 0.0
        %1279 = vmatprep.subr.mxu0 0.0
        %1280 = vmatpush2.msra.mxu0 0.0
        %1281 = vmatprep.subr.mxu0 0.0
        %1282 = vmatpush2.msra.mxu0 0.0
        %1283 = vmatprep.subr.mxu0 0.0
        %1284 = vmatpush2.msra.mxu0 0.0
        %1285 = vmatprep.subr.mxu0 0.0
        %1286 = vmatpush2.msra.mxu0 0.0
        %1287 = vmatprep.mubr.f32.mxu0 0.0
        %1288 = vmatmul.mubr.f32.gmra.mxu0 %v1221
        %v1289 = vpop.f32.mrf.mxu0
        %v1290 = vadd.f32 %v1217, %v1289
        %v1291 = vpop.f32.mrf.mxu0
        %1292 = vdwg.mxu0
        %v1293 = vadd.f32 %v1290, %v607
        %v1294 = vmax.f32 %v1293, 0.0
        %v1296 = vsel %vm455, %v1294, 0
        %1298 = vmatprep.subr.mxu0 0.0
        %1299 = vmatpush1.msra.mxu0 0.0
        %1300 = vmatprep.subr.mxu0 0.0
        %1301 = vmatpush1.msra.mxu0 0.0
        %1302 = vmatprep.subr.mxu0 0.0
        %1303 = vmatpush1.msra.mxu0 0.0
        %1304 = vmatprep.subr.mxu0 0.0
        %1305 = vmatpush1.msra.mxu0 0.0
        %1306 = vmatprep.subr.mxu0 0.0
        %1307 = vmatpush1.msra.mxu0 0.0
        %1308 = vmatprep.subr.mxu0 0.0
        %1309 = vmatpush1.msra.mxu0 0.0
        %1310 = vmatprep.subr.mxu0 0.0
        %1311 = vmatpush1.msra.mxu0 0.0
        %1312 = vmatprep.subr.mxu0 0.0
        %1313 = vmatpush1.msra.mxu0 0.0
        %1314 = vmatprep.subr.mxu0 0.0
        %1315 = vmatpush1.msra.mxu0 0.0
        %1316 = vmatprep.subr.mxu0 0.0
        %1317 = vmatpush1.msra.mxu0 0.0
        %1318 = vmatprep.subr.mxu0 0.0
        %1319 = vmatpush1.msra.mxu0 0.0
        %1320 = vmatprep.subr.mxu0 0.0
        %1321 = vmatpush1.msra.mxu0 0.0
        %1322 = vmatprep.subr.mxu0 0.0
        %1323 = vmatpush1.msra.mxu0 %v451
        %1324 = vmatprep.subr.mxu0 0.0
        %1325 = vmatpush1.msra.mxu0 %v450
        %1326 = vmatprep.subr.mxu0 0.0
        %1327 = vmatpush1.msra.mxu0 %v449
        %1328 = vmatprep.subr.mxu0 0.0
        %1329 = vmatpush1.msra.mxu0 %v448
        %1330 = vmatprep.subr.mxu0 0.0
        %1331 = vmatpush2.msra.mxu0 0.0
        %1332 = vmatprep.subr.mxu0 0.0
        %1333 = vmatpush2.msra.mxu0 0.0
        %1334 = vmatprep.subr.mxu0 0.0
        %1335 = vmatpush2.msra.mxu0 0.0
        %1336 = vmatprep.subr.mxu0 0.0
        %1337 = vmatpush2.msra.mxu0 0.0
        %1338 = vmatprep.subr.mxu0 0.0
        %1339 = vmatpush2.msra.mxu0 0.0
        %1340 = vmatprep.subr.mxu0 0.0
        %1341 = vmatpush2.msra.mxu0 0.0
        %1342 = vmatprep.subr.mxu0 0.0
        %1343 = vmatpush2.msra.mxu0 0.0
        %1344 = vmatprep.subr.mxu0 0.0
        %1345 = vmatpush2.msra.mxu0 0.0
        %1346 = vmatprep.subr.mxu0 0.0
        %1347 = vmatpush2.msra.mxu0 0.0
        %1348 = vmatprep.subr.mxu0 0.0
        %1349 = vmatpush2.msra.mxu0 0.0
        %1350 = vmatprep.subr.mxu0 0.0
        %1351 = vmatpush2.msra.mxu0 0.0
        %1352 = vmatprep.subr.mxu0 0.0
        %1353 = vmatpush2.msra.mxu0 0.0
        %1354 = vmatprep.subr.mxu0 0.0
        %1355 = vmatpush2.msra.mxu0 0.0
        %1356 = vmatprep.subr.mxu0 0.0
        %1357 = vmatpush2.msra.mxu0 0.0
        %1358 = vmatprep.subr.mxu0 0.0
        %1359 = vmatpush2.msra.mxu0 0.0
        %1360 = vmatprep.subr.mxu0 0.0
        %1361 = vmatpush2.msra.mxu0 0.0
        %1362 = vmatprep.mubr.f32.mxu0 0.0
        %1363 = vmatmul.mubr.f32.gmra.mxu0 %v1296
        %v1364 = vpop.f32.mrf.mxu0
        %v1365 = vadd.f32 %v615, %v1364
        %v1366 = vpop.f32.mrf.mxu0
        %1367 = vdwg.mxu0
        %v1368 = vtanh.pop %v1365
        %s1369 = scalar_lea.vmem %s369, 32 [#allocation2]
        %v1370 = vld [vmem:[%s1369] sm:$0xff]
        %1372 = vrot.lane.b32.xlu0 %v1365, 120
        %v1373 = vpop.permute.xlu0 %1372
        %v1374 = vsel %vm455, %v1373, 0
        %1376 = vmatprep.subr.mxu0 0.0
        %1377 = vmatpush1.msra.mxu0 0.0
        %1378 = vmatprep.subr.mxu0 0.0
        %1379 = vmatpush1.msra.mxu0 0.0
        %1380 = vmatprep.subr.mxu0 0.0
        %1381 = vmatpush1.msra.mxu0 0.0
        %1382 = vmatprep.subr.mxu0 0.0
        %1383 = vmatpush1.msra.mxu0 0.0
        %1384 = vmatprep.subr.mxu0 0.0
        %1385 = vmatpush1.msra.mxu0 0.0
        %1386 = vmatprep.subr.mxu0 0.0
        %1387 = vmatpush1.msra.mxu0 0.0
        %1388 = vmatprep.subr.mxu0 0.0
        %1389 = vmatpush1.msra.mxu0 0.0
        %1390 = vmatprep.subr.mxu0 0.0
        %1391 = vmatpush1.msra.mxu0 0.0
        %1392 = vmatprep.subr.mxu0 0.0
        %1393 = vmatpush1.msra.mxu0 0.0
        %1394 = vmatprep.subr.mxu0 0.0
        %1395 = vmatpush1.msra.mxu0 0.0
        %1396 = vmatprep.subr.mxu0 0.0
        %1397 = vmatpush1.msra.mxu0 0.0
        %1398 = vmatprep.subr.mxu0 0.0
        %1399 = vmatpush1.msra.mxu0 0.0
        %1400 = vmatprep.subr.mxu0 0.0
        %1401 = vmatpush1.msra.mxu0 %v446
        %1402 = vmatprep.subr.mxu0 0.0
        %1403 = vmatpush1.msra.mxu0 %v445
        %1404 = vmatprep.subr.mxu0 0.0
        %1405 = vmatpush1.msra.mxu0 %v444
        %1406 = vmatprep.subr.mxu0 0.0
        %1407 = vmatpush1.msra.mxu0 %v443
        %1408 = vmatprep.subr.mxu0 0.0
        %1409 = vmatpush2.msra.mxu0 0.0
        %1410 = vmatprep.subr.mxu0 0.0
        %1411 = vmatpush2.msra.mxu0 0.0
        %1412 = vmatprep.subr.mxu0 0.0
        %1413 = vmatpush2.msra.mxu0 0.0
        %1414 = vmatprep.subr.mxu0 0.0
        %1415 = vmatpush2.msra.mxu0 0.0
        %1416 = vmatprep.subr.mxu0 0.0
        %1417 = vmatpush2.msra.mxu0 0.0
        %1418 = vmatprep.subr.mxu0 0.0
        %1419 = vmatpush2.msra.mxu0 0.0
        %1420 = vmatprep.subr.mxu0 0.0
        %1421 = vmatpush2.msra.mxu0 0.0
        %1422 = vmatprep.subr.mxu0 0.0
        %1423 = vmatpush2.msra.mxu0 0.0
        %1424 = vmatprep.subr.mxu0 0.0
        %1425 = vmatpush2.msra.mxu0 0.0
        %1426 = vmatprep.subr.mxu0 0.0
        %1427 = vmatpush2.msra.mxu0 0.0
        %1428 = vmatprep.subr.mxu0 0.0
        %1429 = vmatpush2.msra.mxu0 0.0
        %1430 = vmatprep.subr.mxu0 0.0
        %1431 = vmatpush2.msra.mxu0 0.0
        %1432 = vmatprep.subr.mxu0 0.0
        %1433 = vmatpush2.msra.mxu0 0.0
        %1434 = vmatprep.subr.mxu0 0.0
        %1435 = vmatpush2.msra.mxu0 0.0
        %1436 = vmatprep.subr.mxu0 0.0
        %1437 = vmatpush2.msra.mxu0 0.0
        %1438 = vmatprep.subr.mxu0 0.0
        %1439 = vmatpush2.msra.mxu0 0.0
        %1440 = vmatprep.mubr.f32.mxu0 0.0
        %1441 = vmatmul.mubr.f32.gmra.mxu0 %v1374
        %v1442 = vpop.f32.mrf.mxu0
        %v1443 = vadd.f32 0.0, %v1442
        %v1444 = vpop.f32.mrf.mxu0
        %1445 = vdwg.mxu0
        %v1447 = vsel %vm529, %v1370, 0
        %1449 = vmatprep.subr.mxu0 0.0
        %1450 = vmatpush1.msra.mxu0 0.0
        %1451 = vmatprep.subr.mxu0 0.0
        %1452 = vmatpush1.msra.mxu0 0.0
        %1453 = vmatprep.subr.mxu0 0.0
        %1454 = vmatpush1.msra.mxu0 0.0
        %1455 = vmatprep.subr.mxu0 0.0
        %1456 = vmatpush1.msra.mxu0 0.0
        %1457 = vmatprep.subr.mxu0 0.0
        %1458 = vmatpush1.msra.mxu0 0.0
        %1459 = vmatprep.subr.mxu0 0.0
        %1460 = vmatpush1.msra.mxu0 0.0
        %1461 = vmatprep.subr.mxu0 0.0
        %1462 = vmatpush1.msra.mxu0 0.0
        %1463 = vmatprep.subr.mxu0 0.0
        %1464 = vmatpush1.msra.mxu0 0.0
        %1465 = vmatprep.subr.mxu0 0.0
        %1466 = vmatpush1.msra.mxu0 0.0
        %1467 = vmatprep.subr.mxu0 0.0
        %1468 = vmatpush1.msra.mxu0 0.0
        %1469 = vmatprep.subr.mxu0 0.0
        %1470 = vmatpush1.msra.mxu0 0.0
        %1471 = vmatprep.subr.mxu0 0.0
        %1472 = vmatpush1.msra.mxu0 0.0
        %1473 = vmatprep.subr.mxu0 0.0
        %1474 = vmatpush1.msra.mxu0 0.0
        %1475 = vmatprep.subr.mxu0 0.0
        %1476 = vmatpush1.msra.mxu0 0.0
        %1477 = vmatprep.subr.mxu0 0.0
        %1478 = vmatpush1.msra.mxu0 %v442
        %1479 = vmatprep.subr.mxu0 0.0
        %1480 = vmatpush1.msra.mxu0 %v441
        %1481 = vmatprep.subr.mxu0 0.0
        %1482 = vmatpush2.msra.mxu0 0.0
        %1483 = vmatprep.subr.mxu0 0.0
        %1484 = vmatpush2.msra.mxu0 0.0
        %1485 = vmatprep.subr.mxu0 0.0
        %1486 = vmatpush2.msra.mxu0 0.0
        %1487 = vmatprep.subr.mxu0 0.0
        %1488 = vmatpush2.msra.mxu0 0.0
        %1489 = vmatprep.subr.mxu0 0.0
        %1490 = vmatpush2.msra.mxu0 0.0
        %1491 = vmatprep.subr.mxu0 0.0
        %1492 = vmatpush2.msra.mxu0 0.0
        %1493 = vmatprep.subr.mxu0 0.0
        %1494 = vmatpush2.msra.mxu0 0.0
        %1495 = vmatprep.subr.mxu0 0.0
        %1496 = vmatpush2.msra.mxu0 0.0
        %1497 = vmatprep.subr.mxu0 0.0
        %1498 = vmatpush2.msra.mxu0 0.0
        %1499 = vmatprep.subr.mxu0 0.0
        %1500 = vmatpush2.msra.mxu0 0.0
        %1501 = vmatprep.subr.mxu0 0.0
        %1502 = vmatpush2.msra.mxu0 0.0
        %1503 = vmatprep.subr.mxu0 0.0
        %1504 = vmatpush2.msra.mxu0 0.0
        %1505 = vmatprep.subr.mxu0 0.0
        %1506 = vmatpush2.msra.mxu0 0.0
        %1507 = vmatprep.subr.mxu0 0.0
        %1508 = vmatpush2.msra.mxu0 0.0
        %1509 = vmatprep.subr.mxu0 0.0
        %1510 = vmatpush2.msra.mxu0 0.0
        %1511 = vmatprep.subr.mxu0 0.0
        %1512 = vmatpush2.msra.mxu0 0.0
        %1513 = vmatprep.mubr.f32.mxu0 0.0
        %1514 = vmatmul.mubr.f32.gmra.mxu0 %v1447
        %v1515 = vpop.f32.mrf.mxu0
        %v1516 = vadd.f32 %v1443, %v1515
        %v1517 = vpop.f32.mrf.mxu0
        %1518 = vdwg.mxu0
        %v1519 = vadd.f32 %v1516, %v607
        %v1520 = vmax.f32 %v1519, 0.0
        %v1522 = vsel %vm455, %v1520, 0
        %1524 = vmatprep.subr.mxu0 0.0
        %1525 = vmatpush1.msra.mxu0 0.0
        %1526 = vmatprep.subr.mxu0 0.0
        %1527 = vmatpush1.msra.mxu0 0.0
        %1528 = vmatprep.subr.mxu0 0.0
        %1529 = vmatpush1.msra.mxu0 0.0
        %1530 = vmatprep.subr.mxu0 0.0
        %1531 = vmatpush1.msra.mxu0 0.0
        %1532 = vmatprep.subr.mxu0 0.0
        %1533 = vmatpush1.msra.mxu0 0.0
        %1534 = vmatprep.subr.mxu0 0.0
        %1535 = vmatpush1.msra.mxu0 0.0
        %1536 = vmatprep.subr.mxu0 0.0
        %1537 = vmatpush1.msra.mxu0 0.0
        %1538 = vmatprep.subr.mxu0 0.0
        %1539 = vmatpush1.msra.mxu0 0.0
        %1540 = vmatprep.subr.mxu0 0.0
        %1541 = vmatpush1.msra.mxu0 0.0
        %1542 = vmatprep.subr.mxu0 0.0
        %1543 = vmatpush1.msra.mxu0 0.0
        %1544 = vmatprep.subr.mxu0 0.0
        %1545 = vmatpush1.msra.mxu0 0.0
        %1546 = vmatprep.subr.mxu0 0.0
        %1547 = vmatpush1.msra.mxu0 0.0
        %1548 = vmatprep.subr.mxu0 0.0
        %1549 = vmatpush1.msra.mxu0 %v451
        %1550 = vmatprep.subr.mxu0 0.0
        %1551 = vmatpush1.msra.mxu0 %v450
        %1552 = vmatprep.subr.mxu0 0.0
        %1553 = vmatpush1.msra.mxu0 %v449
        %1554 = vmatprep.subr.mxu0 0.0
        %1555 = vmatpush1.msra.mxu0 %v448
        %1556 = vmatprep.subr.mxu0 0.0
        %1557 = vmatpush2.msra.mxu0 0.0
        %1558 = vmatprep.subr.mxu0 0.0
        %1559 = vmatpush2.msra.mxu0 0.0
        %1560 = vmatprep.subr.mxu0 0.0
        %1561 = vmatpush2.msra.mxu0 0.0
        %1562 = vmatprep.subr.mxu0 0.0
        %1563 = vmatpush2.msra.mxu0 0.0
        %1564 = vmatprep.subr.mxu0 0.0
        %1565 = vmatpush2.msra.mxu0 0.0
        %1566 = vmatprep.subr.mxu0 0.0
        %1567 = vmatpush2.msra.mxu0 0.0
        %1568 = vmatprep.subr.mxu0 0.0
        %1569 = vmatpush2.msra.mxu0 0.0
        %1570 = vmatprep.subr.mxu0 0.0
        %1571 = vmatpush2.msra.mxu0 0.0
        %1572 = vmatprep.subr.mxu0 0.0
        %1573 = vmatpush2.msra.mxu0 0.0
        %1574 = vmatprep.subr.mxu0 0.0
        %1575 = vmatpush2.msra.mxu0 0.0
        %1576 = vmatprep.subr.mxu0 0.0
        %1577 = vmatpush2.msra.mxu0 0.0
        %1578 = vmatprep.subr.mxu0 0.0
        %1579 = vmatpush2.msra.mxu0 0.0
        %1580 = vmatprep.subr.mxu0 0.0
        %1581 = vmatpush2.msra.mxu0 0.0
        %1582 = vmatprep.subr.mxu0 0.0
        %1583 = vmatpush2.msra.mxu0 0.0
        %1584 = vmatprep.subr.mxu0 0.0
        %1585 = vmatpush2.msra.mxu0 0.0
        %1586 = vmatprep.subr.mxu0 0.0
        %1587 = vmatpush2.msra.mxu0 0.0
        %1588 = vmatprep.mubr.f32.mxu0 0.0
        %1589 = vmatmul.mubr.f32.gmra.mxu0 %v1522
        %v1590 = vpop.f32.mrf.mxu0
        %v1591 = vadd.f32 %v615, %v1590
        %v1592 = vpop.f32.mrf.mxu0
        %1593 = vdwg.mxu0
        %v1594 = vtanh.pop %v1591
        %s1595 = scalar_lea.vmem %s369, 40 [#allocation2]
        %v1596 = vld [vmem:[%s1595] sm:$0xff]
        %1598 = vrot.lane.b32.xlu0 %v1591, 120
        %v1599 = vpop.permute.xlu0 %1598
        %v1600 = vsel %vm455, %v1599, 0
        %1602 = vmatprep.subr.mxu0 0.0
        %1603 = vmatpush1.msra.mxu0 0.0
        %1604 = vmatprep.subr.mxu0 0.0
        %1605 = vmatpush1.msra.mxu0 0.0
        %1606 = vmatprep.subr.mxu0 0.0
        %1607 = vmatpush1.msra.mxu0 0.0
        %1608 = vmatprep.subr.mxu0 0.0
        %1609 = vmatpush1.msra.mxu0 0.0
        %1610 = vmatprep.subr.mxu0 0.0
        %1611 = vmatpush1.msra.mxu0 0.0
        %1612 = vmatprep.subr.mxu0 0.0
        %1613 = vmatpush1.msra.mxu0 0.0
        %1614 = vmatprep.subr.mxu0 0.0
        %1615 = vmatpush1.msra.mxu0 0.0
        %1616 = vmatprep.subr.mxu0 0.0
        %1617 = vmatpush1.msra.mxu0 0.0
        %1618 = vmatprep.subr.mxu0 0.0
        %1619 = vmatpush1.msra.mxu0 0.0
        %1620 = vmatprep.subr.mxu0 0.0
        %1621 = vmatpush1.msra.mxu0 0.0
        %1622 = vmatprep.subr.mxu0 0.0
        %1623 = vmatpush1.msra.mxu0 0.0
        %1624 = vmatprep.subr.mxu0 0.0
        %1625 = vmatpush1.msra.mxu0 0.0
        %1626 = vmatprep.subr.mxu0 0.0
        %1627 = vmatpush1.msra.mxu0 %v446
        %1628 = vmatprep.subr.mxu0 0.0
        %1629 = vmatpush1.msra.mxu0 %v445
        %1630 = vmatprep.subr.mxu0 0.0
        %1631 = vmatpush1.msra.mxu0 %v444
        %1632 = vmatprep.subr.mxu0 0.0
        %1633 = vmatpush1.msra.mxu0 %v443
        %1634 = vmatprep.subr.mxu0 0.0
        %1635 = vmatpush2.msra.mxu0 0.0
        %1636 = vmatprep.subr.mxu0 0.0
        %1637 = vmatpush2.msra.mxu0 0.0
        %1638 = vmatprep.subr.mxu0 0.0
        %1639 = vmatpush2.msra.mxu0 0.0
        %1640 = vmatprep.subr.mxu0 0.0
        %1641 = vmatpush2.msra.mxu0 0.0
        %1642 = vmatprep.subr.mxu0 0.0
        %1643 = vmatpush2.msra.mxu0 0.0
        %1644 = vmatprep.subr.mxu0 0.0
        %1645 = vmatpush2.msra.mxu0 0.0
        %1646 = vmatprep.subr.mxu0 0.0
        %1647 = vmatpush2.msra.mxu0 0.0
        %1648 = vmatprep.subr.mxu0 0.0
        %1649 = vmatpush2.msra.mxu0 0.0
        %1650 = vmatprep.subr.mxu0 0.0
        %1651 = vmatpush2.msra.mxu0 0.0
        %1652 = vmatprep.subr.mxu0 0.0
        %1653 = vmatpush2.msra.mxu0 0.0
        %1654 = vmatprep.subr.mxu0 0.0
        %1655 = vmatpush2.msra.mxu0 0.0
        %1656 = vmatprep.subr.mxu0 0.0
        %1657 = vmatpush2.msra.mxu0 0.0
        %1658 = vmatprep.subr.mxu0 0.0
        %1659 = vmatpush2.msra.mxu0 0.0
        %1660 = vmatprep.subr.mxu0 0.0
        %1661 = vmatpush2.msra.mxu0 0.0
        %1662 = vmatprep.subr.mxu0 0.0
        %1663 = vmatpush2.msra.mxu0 0.0
        %1664 = vmatprep.subr.mxu0 0.0
        %1665 = vmatpush2.msra.mxu0 0.0
        %1666 = vmatprep.mubr.f32.mxu0 0.0
        %1667 = vmatmul.mubr.f32.gmra.mxu0 %v1600
        %v1668 = vpop.f32.mrf.mxu0
        %v1669 = vadd.f32 0.0, %v1668
        %v1670 = vpop.f32.mrf.mxu0
        %1671 = vdwg.mxu0
        %v1673 = vsel %vm529, %v1596, 0
        %1675 = vmatprep.subr.mxu0 0.0
        %1676 = vmatpush1.msra.mxu0 0.0
        %1677 = vmatprep.subr.mxu0 0.0
        %1678 = vmatpush1.msra.mxu0 0.0
        %1679 = vmatprep.subr.mxu0 0.0
        %1680 = vmatpush1.msra.mxu0 0.0
        %1681 = vmatprep.subr.mxu0 0.0
        %1682 = vmatpush1.msra.mxu0 0.0
        %1683 = vmatprep.subr.mxu0 0.0
        %1684 = vmatpush1.msra.mxu0 0.0
        %1685 = vmatprep.subr.mxu0 0.0
        %1686 = vmatpush1.msra.mxu0 0.0
        %1687 = vmatprep.subr.mxu0 0.0
        %1688 = vmatpush1.msra.mxu0 0.0
        %1689 = vmatprep.subr.mxu0 0.0
        %1690 = vmatpush1.msra.mxu0 0.0
        %1691 = vmatprep.subr.mxu0 0.0
        %1692 = vmatpush1.msra.mxu0 0.0
        %1693 = vmatprep.subr.mxu0 0.0
        %1694 = vmatpush1.msra.mxu0 0.0
        %1695 = vmatprep.subr.mxu0 0.0
        %1696 = vmatpush1.msra.mxu0 0.0
        %1697 = vmatprep.subr.mxu0 0.0
        %1698 = vmatpush1.msra.mxu0 0.0
        %1699 = vmatprep.subr.mxu0 0.0
        %1700 = vmatpush1.msra.mxu0 0.0
        %1701 = vmatprep.subr.mxu0 0.0
        %1702 = vmatpush1.msra.mxu0 0.0
        %1703 = vmatprep.subr.mxu0 0.0
        %1704 = vmatpush1.msra.mxu0 %v442
        %1705 = vmatprep.subr.mxu0 0.0
        %1706 = vmatpush1.msra.mxu0 %v441
        %1707 = vmatprep.subr.mxu0 0.0
        %1708 = vmatpush2.msra.mxu0 0.0
        %1709 = vmatprep.subr.mxu0 0.0
        %1710 = vmatpush2.msra.mxu0 0.0
        %1711 = vmatprep.subr.mxu0 0.0
        %1712 = vmatpush2.msra.mxu0 0.0
        %1713 = vmatprep.subr.mxu0 0.0
        %1714 = vmatpush2.msra.mxu0 0.0
        %1715 = vmatprep.subr.mxu0 0.0
        %1716 = vmatpush2.msra.mxu0 0.0
        %1717 = vmatprep.subr.mxu0 0.0
        %1718 = vmatpush2.msra.mxu0 0.0
        %1719 = vmatprep.subr.mxu0 0.0
        %1720 = vmatpush2.msra.mxu0 0.0
        %1721 = vmatprep.subr.mxu0 0.0
        %1722 = vmatpush2.msra.mxu0 0.0
        %1723 = vmatprep.subr.mxu0 0.0
        %1724 = vmatpush2.msra.mxu0 0.0
        %1725 = vmatprep.subr.mxu0 0.0
        %1726 = vmatpush2.msra.mxu0 0.0
        %1727 = vmatprep.subr.mxu0 0.0
        %1728 = vmatpush2.msra.mxu0 0.0
        %1729 = vmatprep.subr.mxu0 0.0
        %1730 = vmatpush2.msra.mxu0 0.0
        %1731 = vmatprep.subr.mxu0 0.0
        %1732 = vmatpush2.msra.mxu0 0.0
        %1733 = vmatprep.subr.mxu0 0.0
        %1734 = vmatpush2.msra.mxu0 0.0
        %1735 = vmatprep.subr.mxu0 0.0
        %1736 = vmatpush2.msra.mxu0 0.0
        %1737 = vmatprep.subr.mxu0 0.0
        %1738 = vmatpush2.msra.mxu0 0.0
        %1739 = vmatprep.mubr.f32.mxu0 0.0
        %1740 = vmatmul.mubr.f32.gmra.mxu0 %v1673
        %v1741 = vpop.f32.mrf.mxu0
        %v1742 = vadd.f32 %v1669, %v1741
        %v1743 = vpop.f32.mrf.mxu0
        %1744 = vdwg.mxu0
        %v1745 = vadd.f32 %v1742, %v607
        %v1746 = vmax.f32 %v1745, 0.0
        %v1748 = vsel %vm455, %v1746, 0
        %1750 = vmatprep.subr.mxu0 0.0
        %1751 = vmatpush1.msra.mxu0 0.0
        %1752 = vmatprep.subr.mxu0 0.0
        %1753 = vmatpush1.msra.mxu0 0.0
        %1754 = vmatprep.subr.mxu0 0.0
        %1755 = vmatpush1.msra.mxu0 0.0
        %1756 = vmatprep.subr.mxu0 0.0
        %1757 = vmatpush1.msra.mxu0 0.0
        %1758 = vmatprep.subr.mxu0 0.0
        %1759 = vmatpush1.msra.mxu0 0.0
        %1760 = vmatprep.subr.mxu0 0.0
        %1761 = vmatpush1.msra.mxu0 0.0
        %1762 = vmatprep.subr.mxu0 0.0
        %1763 = vmatpush1.msra.mxu0 0.0
        %1764 = vmatprep.subr.mxu0 0.0
        %1765 = vmatpush1.msra.mxu0 0.0
        %1766 = vmatprep.subr.mxu0 0.0
        %1767 = vmatpush1.msra.mxu0 0.0
        %1768 = vmatprep.subr.mxu0 0.0
        %1769 = vmatpush1.msra.mxu0 0.0
        %1770 = vmatprep.subr.mxu0 0.0
        %1771 = vmatpush1.msra.mxu0 0.0
        %1772 = vmatprep.subr.mxu0 0.0
        %1773 = vmatpush1.msra.mxu0 0.0
        %1774 = vmatprep.subr.mxu0 0.0
        %1775 = vmatpush1.msra.mxu0 %v451
        %1776 = vmatprep.subr.mxu0 0.0
        %1777 = vmatpush1.msra.mxu0 %v450
        %1778 = vmatprep.subr.mxu0 0.0
        %1779 = vmatpush1.msra.mxu0 %v449
        %1780 = vmatprep.subr.mxu0 0.0
        %1781 = vmatpush1.msra.mxu0 %v448
        %1782 = vmatprep.subr.mxu0 0.0
        %1783 = vmatpush2.msra.mxu0 0.0
        %1784 = vmatprep.subr.mxu0 0.0
        %1785 = vmatpush2.msra.mxu0 0.0
        %1786 = vmatprep.subr.mxu0 0.0
        %1787 = vmatpush2.msra.mxu0 0.0
        %1788 = vmatprep.subr.mxu0 0.0
        %1789 = vmatpush2.msra.mxu0 0.0
        %1790 = vmatprep.subr.mxu0 0.0
        %1791 = vmatpush2.msra.mxu0 0.0
        %1792 = vmatprep.subr.mxu0 0.0
        %1793 = vmatpush2.msra.mxu0 0.0
        %1794 = vmatprep.subr.mxu0 0.0
        %1795 = vmatpush2.msra.mxu0 0.0
        %1796 = vmatprep.subr.mxu0 0.0
        %1797 = vmatpush2.msra.mxu0 0.0
        %1798 = vmatprep.subr.mxu0 0.0
        %1799 = vmatpush2.msra.mxu0 0.0
        %1800 = vmatprep.subr.mxu0 0.0
        %1801 = vmatpush2.msra.mxu0 0.0
        %1802 = vmatprep.subr.mxu0 0.0
        %1803 = vmatpush2.msra.mxu0 0.0
        %1804 = vmatprep.subr.mxu0 0.0
        %1805 = vmatpush2.msra.mxu0 0.0
        %1806 = vmatprep.subr.mxu0 0.0
        %1807 = vmatpush2.msra.mxu0 0.0
        %1808 = vmatprep.subr.mxu0 0.0
        %1809 = vmatpush2.msra.mxu0 0.0
        %1810 = vmatprep.subr.mxu0 0.0
        %1811 = vmatpush2.msra.mxu0 0.0
        %1812 = vmatprep.subr.mxu0 0.0
        %1813 = vmatpush2.msra.mxu0 0.0
        %1814 = vmatprep.mubr.f32.mxu0 0.0
        %1815 = vmatmul.mubr.f32.gmra.mxu0 %v1748
        %v1816 = vpop.f32.mrf.mxu0
        %v1817 = vadd.f32 %v615, %v1816
        %v1818 = vpop.f32.mrf.mxu0
        %1819 = vdwg.mxu0
        %v1820 = vtanh.pop %v1817
        %s1821 = scalar_lea.vmem %s369, 48 [#allocation2]
        %v1822 = vld [vmem:[%s1821] sm:$0xff]
        %1824 = vrot.lane.b32.xlu0 %v1817, 120
        %v1825 = vpop.permute.xlu0 %1824
        %v1826 = vsel %vm455, %v1825, 0
        %1828 = vmatprep.subr.mxu0 0.0
        %1829 = vmatpush1.msra.mxu0 0.0
        %1830 = vmatprep.subr.mxu0 0.0
        %1831 = vmatpush1.msra.mxu0 0.0
        %1832 = vmatprep.subr.mxu0 0.0
        %1833 = vmatpush1.msra.mxu0 0.0
        %1834 = vmatprep.subr.mxu0 0.0
        %1835 = vmatpush1.msra.mxu0 0.0
        %1836 = vmatprep.subr.mxu0 0.0
        %1837 = vmatpush1.msra.mxu0 0.0
        %1838 = vmatprep.subr.mxu0 0.0
        %1839 = vmatpush1.msra.mxu0 0.0
        %1840 = vmatprep.subr.mxu0 0.0
        %1841 = vmatpush1.msra.mxu0 0.0
        %1842 = vmatprep.subr.mxu0 0.0
        %1843 = vmatpush1.msra.mxu0 0.0
        %1844 = vmatprep.subr.mxu0 0.0
        %1845 = vmatpush1.msra.mxu0 0.0
        %1846 = vmatprep.subr.mxu0 0.0
        %1847 = vmatpush1.msra.mxu0 0.0
        %1848 = vmatprep.subr.mxu0 0.0
        %1849 = vmatpush1.msra.mxu0 0.0
        %1850 = vmatprep.subr.mxu0 0.0
        %1851 = vmatpush1.msra.mxu0 0.0
        %1852 = vmatprep.subr.mxu0 0.0
        %1853 = vmatpush1.msra.mxu0 %v446
        %1854 = vmatprep.subr.mxu0 0.0
        %1855 = vmatpush1.msra.mxu0 %v445
        %1856 = vmatprep.subr.mxu0 0.0
        %1857 = vmatpush1.msra.mxu0 %v444
        %1858 = vmatprep.subr.mxu0 0.0
        %1859 = vmatpush1.msra.mxu0 %v443
        %1860 = vmatprep.subr.mxu0 0.0
        %1861 = vmatpush2.msra.mxu0 0.0
        %1862 = vmatprep.subr.mxu0 0.0
        %1863 = vmatpush2.msra.mxu0 0.0
        %1864 = vmatprep.subr.mxu0 0.0
        %1865 = vmatpush2.msra.mxu0 0.0
        %1866 = vmatprep.subr.mxu0 0.0
        %1867 = vmatpush2.msra.mxu0 0.0
        %1868 = vmatprep.subr.mxu0 0.0
        %1869 = vmatpush2.msra.mxu0 0.0
        %1870 = vmatprep.subr.mxu0 0.0
        %1871 = vmatpush2.msra.mxu0 0.0
        %1872 = vmatprep.subr.mxu0 0.0
        %1873 = vmatpush2.msra.mxu0 0.0
        %1874 = vmatprep.subr.mxu0 0.0
        %1875 = vmatpush2.msra.mxu0 0.0
        %1876 = vmatprep.subr.mxu0 0.0
        %1877 = vmatpush2.msra.mxu0 0.0
        %1878 = vmatprep.subr.mxu0 0.0
        %1879 = vmatpush2.msra.mxu0 0.0
        %1880 = vmatprep.subr.mxu0 0.0
        %1881 = vmatpush2.msra.mxu0 0.0
        %1882 = vmatprep.subr.mxu0 0.0
        %1883 = vmatpush2.msra.mxu0 0.0
        %1884 = vmatprep.subr.mxu0 0.0
        %1885 = vmatpush2.msra.mxu0 0.0
        %1886 = vmatprep.subr.mxu0 0.0
        %1887 = vmatpush2.msra.mxu0 0.0
        %1888 = vmatprep.subr.mxu0 0.0
        %1889 = vmatpush2.msra.mxu0 0.0
        %1890 = vmatprep.subr.mxu0 0.0
        %1891 = vmatpush2.msra.mxu0 0.0
        %1892 = vmatprep.mubr.f32.mxu0 0.0
        %1893 = vmatmul.mubr.f32.gmra.mxu0 %v1826
        %v1894 = vpop.f32.mrf.mxu0
        %v1895 = vadd.f32 0.0, %v1894
        %v1896 = vpop.f32.mrf.mxu0
        %1897 = vdwg.mxu0
        %v1899 = vsel %vm529, %v1822, 0
        %1901 = vmatprep.subr.mxu0 0.0
        %1902 = vmatpush1.msra.mxu0 0.0
        %1903 = vmatprep.subr.mxu0 0.0
        %1904 = vmatpush1.msra.mxu0 0.0
        %1905 = vmatprep.subr.mxu0 0.0
        %1906 = vmatpush1.msra.mxu0 0.0
        %1907 = vmatprep.subr.mxu0 0.0
        %1908 = vmatpush1.msra.mxu0 0.0
        %1909 = vmatprep.subr.mxu0 0.0
        %1910 = vmatpush1.msra.mxu0 0.0
        %1911 = vmatprep.subr.mxu0 0.0
        %1912 = vmatpush1.msra.mxu0 0.0
        %1913 = vmatprep.subr.mxu0 0.0
        %1914 = vmatpush1.msra.mxu0 0.0
        %1915 = vmatprep.subr.mxu0 0.0
        %1916 = vmatpush1.msra.mxu0 0.0
        %1917 = vmatprep.subr.mxu0 0.0
        %1918 = vmatpush1.msra.mxu0 0.0
        %1919 = vmatprep.subr.mxu0 0.0
        %1920 = vmatpush1.msra.mxu0 0.0
        %1921 = vmatprep.subr.mxu0 0.0
        %1922 = vmatpush1.msra.mxu0 0.0
        %1923 = vmatprep.subr.mxu0 0.0
        %1924 = vmatpush1.msra.mxu0 0.0
        %1925 = vmatprep.subr.mxu0 0.0
        %1926 = vmatpush1.msra.mxu0 0.0
        %1927 = vmatprep.subr.mxu0 0.0
        %1928 = vmatpush1.msra.mxu0 0.0
        %1929 = vmatprep.subr.mxu0 0.0
        %1930 = vmatpush1.msra.mxu0 %v442
        %1931 = vmatprep.subr.mxu0 0.0
        %1932 = vmatpush1.msra.mxu0 %v441
        %1933 = vmatprep.subr.mxu0 0.0
        %1934 = vmatpush2.msra.mxu0 0.0
        %1935 = vmatprep.subr.mxu0 0.0
        %1936 = vmatpush2.msra.mxu0 0.0
        %1937 = vmatprep.subr.mxu0 0.0
        %1938 = vmatpush2.msra.mxu0 0.0
        %1939 = vmatprep.subr.mxu0 0.0
        %1940 = vmatpush2.msra.mxu0 0.0
        %1941 = vmatprep.subr.mxu0 0.0
        %1942 = vmatpush2.msra.mxu0 0.0
        %1943 = vmatprep.subr.mxu0 0.0
        %1944 = vmatpush2.msra.mxu0 0.0
        %1945 = vmatprep.subr.mxu0 0.0
        %1946 = vmatpush2.msra.mxu0 0.0
        %1947 = vmatprep.subr.mxu0 0.0
        %1948 = vmatpush2.msra.mxu0 0.0
        %1949 = vmatprep.subr.mxu0 0.0
        %1950 = vmatpush2.msra.mxu0 0.0
        %1951 = vmatprep.subr.mxu0 0.0
        %1952 = vmatpush2.msra.mxu0 0.0
        %1953 = vmatprep.subr.mxu0 0.0
        %1954 = vmatpush2.msra.mxu0 0.0
        %1955 = vmatprep.subr.mxu0 0.0
        %1956 = vmatpush2.msra.mxu0 0.0
        %1957 = vmatprep.subr.mxu0 0.0
        %1958 = vmatpush2.msra.mxu0 0.0
        %1959 = vmatprep.subr.mxu0 0.0
        %1960 = vmatpush2.msra.mxu0 0.0
        %1961 = vmatprep.subr.mxu0 0.0
        %1962 = vmatpush2.msra.mxu0 0.0
        %1963 = vmatprep.subr.mxu0 0.0
        %1964 = vmatpush2.msra.mxu0 0.0
        %1965 = vmatprep.mubr.f32.mxu0 0.0
        %1966 = vmatmul.mubr.f32.gmra.mxu0 %v1899
        %v1967 = vpop.f32.mrf.mxu0
        %v1968 = vadd.f32 %v1895, %v1967
        %v1969 = vpop.f32.mrf.mxu0
        %1970 = vdwg.mxu0
        %v1971 = vadd.f32 %v1968, %v607
        %v1972 = vmax.f32 %v1971, 0.0
        %v1974 = vsel %vm455, %v1972, 0
        %1976 = vmatprep.subr.mxu0 0.0
        %1977 = vmatpush1.msra.mxu0 0.0
        %1978 = vmatprep.subr.mxu0 0.0
        %1979 = vmatpush1.msra.mxu0 0.0
        %1980 = vmatprep.subr.mxu0 0.0
        %1981 = vmatpush1.msra.mxu0 0.0
        %1982 = vmatprep.subr.mxu0 0.0
        %1983 = vmatpush1.msra.mxu0 0.0
        %1984 = vmatprep.subr.mxu0 0.0
        %1985 = vmatpush1.msra.mxu0 0.0
        %1986 = vmatprep.subr.mxu0 0.0
        %1987 = vmatpush1.msra.mxu0 0.0
        %1988 = vmatprep.subr.mxu0 0.0
        %1989 = vmatpush1.msra.mxu0 0.0
        %1990 = vmatprep.subr.mxu0 0.0
        %1991 = vmatpush1.msra.mxu0 0.0
        %1992 = vmatprep.subr.mxu0 0.0
        %1993 = vmatpush1.msra.mxu0 0.0
        %1994 = vmatprep.subr.mxu0 0.0
        %1995 = vmatpush1.msra.mxu0 0.0
        %1996 = vmatprep.subr.mxu0 0.0
        %1997 = vmatpush1.msra.mxu0 0.0
        %1998 = vmatprep.subr.mxu0 0.0
        %1999 = vmatpush1.msra.mxu0 0.0
        %2000 = vmatprep.subr.mxu0 0.0
        %2001 = vmatpush1.msra.mxu0 %v451
        %2002 = vmatprep.subr.mxu0 0.0
        %2003 = vmatpush1.msra.mxu0 %v450
        %2004 = vmatprep.subr.mxu0 0.0
        %2005 = vmatpush1.msra.mxu0 %v449
        %2006 = vmatprep.subr.mxu0 0.0
        %2007 = vmatpush1.msra.mxu0 %v448
        %2008 = vmatprep.subr.mxu0 0.0
        %2009 = vmatpush2.msra.mxu0 0.0
        %2010 = vmatprep.subr.mxu0 0.0
        %2011 = vmatpush2.msra.mxu0 0.0
        %2012 = vmatprep.subr.mxu0 0.0
        %2013 = vmatpush2.msra.mxu0 0.0
        %2014 = vmatprep.subr.mxu0 0.0
        %2015 = vmatpush2.msra.mxu0 0.0
        %2016 = vmatprep.subr.mxu0 0.0
        %2017 = vmatpush2.msra.mxu0 0.0
        %2018 = vmatprep.subr.mxu0 0.0
        %2019 = vmatpush2.msra.mxu0 0.0
        %2020 = vmatprep.subr.mxu0 0.0
        %2021 = vmatpush2.msra.mxu0 0.0
        %2022 = vmatprep.subr.mxu0 0.0
        %2023 = vmatpush2.msra.mxu0 0.0
        %2024 = vmatprep.subr.mxu0 0.0
        %2025 = vmatpush2.msra.mxu0 0.0
        %2026 = vmatprep.subr.mxu0 0.0
        %2027 = vmatpush2.msra.mxu0 0.0
        %2028 = vmatprep.subr.mxu0 0.0
        %2029 = vmatpush2.msra.mxu0 0.0
        %2030 = vmatprep.subr.mxu0 0.0
        %2031 = vmatpush2.msra.mxu0 0.0
        %2032 = vmatprep.subr.mxu0 0.0
        %2033 = vmatpush2.msra.mxu0 0.0
        %2034 = vmatprep.subr.mxu0 0.0
        %2035 = vmatpush2.msra.mxu0 0.0
        %2036 = vmatprep.subr.mxu0 0.0
        %2037 = vmatpush2.msra.mxu0 0.0
        %2038 = vmatprep.subr.mxu0 0.0
        %2039 = vmatpush2.msra.mxu0 0.0
        %2040 = vmatprep.mubr.f32.mxu0 0.0
        %2041 = vmatmul.mubr.f32.gmra.mxu0 %v1974
        %v2042 = vpop.f32.mrf.mxu0
        %v2043 = vadd.f32 %v615, %v2042
        %v2044 = vpop.f32.mrf.mxu0
        %2045 = vdwg.mxu0
        %v2046 = vtanh.pop %v2043
        %s2047 = scalar_lea.vmem %s369, 56 [#allocation2]
        %v2048 = vld [vmem:[%s2047] sm:$0xff]
        %2050 = vrot.lane.b32.xlu0 %v2043, 120
        %v2051 = vpop.permute.xlu0 %2050
        %v2052 = vsel %vm455, %v2051, 0
        %2054 = vmatprep.subr.mxu0 0.0
        %2055 = vmatpush1.msra.mxu0 0.0
        %2056 = vmatprep.subr.mxu0 0.0
        %2057 = vmatpush1.msra.mxu0 0.0
        %2058 = vmatprep.subr.mxu0 0.0
        %2059 = vmatpush1.msra.mxu0 0.0
        %2060 = vmatprep.subr.mxu0 0.0
        %2061 = vmatpush1.msra.mxu0 0.0
        %2062 = vmatprep.subr.mxu0 0.0
        %2063 = vmatpush1.msra.mxu0 0.0
        %2064 = vmatprep.subr.mxu0 0.0
        %2065 = vmatpush1.msra.mxu0 0.0
        %2066 = vmatprep.subr.mxu0 0.0
        %2067 = vmatpush1.msra.mxu0 0.0
        %2068 = vmatprep.subr.mxu0 0.0
        %2069 = vmatpush1.msra.mxu0 0.0
        %2070 = vmatprep.subr.mxu0 0.0
        %2071 = vmatpush1.msra.mxu0 0.0
        %2072 = vmatprep.subr.mxu0 0.0
        %2073 = vmatpush1.msra.mxu0 0.0
        %2074 = vmatprep.subr.mxu0 0.0
        %2075 = vmatpush1.msra.mxu0 0.0
        %2076 = vmatprep.subr.mxu0 0.0
        %2077 = vmatpush1.msra.mxu0 0.0
        %2078 = vmatprep.subr.mxu0 0.0
        %2079 = vmatpush1.msra.mxu0 %v446
        %2080 = vmatprep.subr.mxu0 0.0
        %2081 = vmatpush1.msra.mxu0 %v445
        %2082 = vmatprep.subr.mxu0 0.0
        %2083 = vmatpush1.msra.mxu0 %v444
        %2084 = vmatprep.subr.mxu0 0.0
        %2085 = vmatpush1.msra.mxu0 %v443
        %2086 = vmatprep.subr.mxu0 0.0
        %2087 = vmatpush2.msra.mxu0 0.0
        %2088 = vmatprep.subr.mxu0 0.0
        %2089 = vmatpush2.msra.mxu0 0.0
        %2090 = vmatprep.subr.mxu0 0.0
        %2091 = vmatpush2.msra.mxu0 0.0
        %2092 = vmatprep.subr.mxu0 0.0
        %2093 = vmatpush2.msra.mxu0 0.0
        %2094 = vmatprep.subr.mxu0 0.0
        %2095 = vmatpush2.msra.mxu0 0.0
        %2096 = vmatprep.subr.mxu0 0.0
        %2097 = vmatpush2.msra.mxu0 0.0
        %2098 = vmatprep.subr.mxu0 0.0
        %2099 = vmatpush2.msra.mxu0 0.0
        %2100 = vmatprep.subr.mxu0 0.0
        %2101 = vmatpush2.msra.mxu0 0.0
        %2102 = vmatprep.subr.mxu0 0.0
        %2103 = vmatpush2.msra.mxu0 0.0
        %2104 = vmatprep.subr.mxu0 0.0
        %2105 = vmatpush2.msra.mxu0 0.0
        %2106 = vmatprep.subr.mxu0 0.0
        %2107 = vmatpush2.msra.mxu0 0.0
        %2108 = vmatprep.subr.mxu0 0.0
        %2109 = vmatpush2.msra.mxu0 0.0
        %2110 = vmatprep.subr.mxu0 0.0
        %2111 = vmatpush2.msra.mxu0 0.0
        %2112 = vmatprep.subr.mxu0 0.0
        %2113 = vmatpush2.msra.mxu0 0.0
        %2114 = vmatprep.subr.mxu0 0.0
        %2115 = vmatpush2.msra.mxu0 0.0
        %2116 = vmatprep.subr.mxu0 0.0
        %2117 = vmatpush2.msra.mxu0 0.0
        %2118 = vmatprep.mubr.f32.mxu0 0.0
        %2119 = vmatmul.mubr.f32.gmra.mxu0 %v2052
        %v2120 = vpop.f32.mrf.mxu0
        %v2121 = vadd.f32 0.0, %v2120
        %v2122 = vpop.f32.mrf.mxu0
        %2123 = vdwg.mxu0
        %v2125 = vsel %vm529, %v2048, 0
        %2127 = vmatprep.subr.mxu0 0.0
        %2128 = vmatpush1.msra.mxu0 0.0
        %2129 = vmatprep.subr.mxu0 0.0
        %2130 = vmatpush1.msra.mxu0 0.0
        %2131 = vmatprep.subr.mxu0 0.0
        %2132 = vmatpush1.msra.mxu0 0.0
        %2133 = vmatprep.subr.mxu0 0.0
        %2134 = vmatpush1.msra.mxu0 0.0
        %2135 = vmatprep.subr.mxu0 0.0
        %2136 = vmatpush1.msra.mxu0 0.0
        %2137 = vmatprep.subr.mxu0 0.0
        %2138 = vmatpush1.msra.mxu0 0.0
        %2139 = vmatprep.subr.mxu0 0.0
        %2140 = vmatpush1.msra.mxu0 0.0
        %2141 = vmatprep.subr.mxu0 0.0
        %2142 = vmatpush1.msra.mxu0 0.0
        %2143 = vmatprep.subr.mxu0 0.0
        %2144 = vmatpush1.msra.mxu0 0.0
        %2145 = vmatprep.subr.mxu0 0.0
        %2146 = vmatpush1.msra.mxu0 0.0
        %2147 = vmatprep.subr.mxu0 0.0
        %2148 = vmatpush1.msra.mxu0 0.0
        %2149 = vmatprep.subr.mxu0 0.0
        %2150 = vmatpush1.msra.mxu0 0.0
        %2151 = vmatprep.subr.mxu0 0.0
        %2152 = vmatpush1.msra.mxu0 0.0
        %2153 = vmatprep.subr.mxu0 0.0
        %2154 = vmatpush1.msra.mxu0 0.0
        %2155 = vmatprep.subr.mxu0 0.0
        %2156 = vmatpush1.msra.mxu0 %v442
        %2157 = vmatprep.subr.mxu0 0.0
        %2158 = vmatpush1.msra.mxu0 %v441
        %2159 = vmatprep.subr.mxu0 0.0
        %2160 = vmatpush2.msra.mxu0 0.0
        %2161 = vmatprep.subr.mxu0 0.0
        %2162 = vmatpush2.msra.mxu0 0.0
        %2163 = vmatprep.subr.mxu0 0.0
        %2164 = vmatpush2.msra.mxu0 0.0
        %2165 = vmatprep.subr.mxu0 0.0
        %2166 = vmatpush2.msra.mxu0 0.0
        %2167 = vmatprep.subr.mxu0 0.0
        %2168 = vmatpush2.msra.mxu0 0.0
        %2169 = vmatprep.subr.mxu0 0.0
        %2170 = vmatpush2.msra.mxu0 0.0
        %2171 = vmatprep.subr.mxu0 0.0
        %2172 = vmatpush2.msra.mxu0 0.0
        %2173 = vmatprep.subr.mxu0 0.0
        %2174 = vmatpush2.msra.mxu0 0.0
        %2175 = vmatprep.subr.mxu0 0.0
        %2176 = vmatpush2.msra.mxu0 0.0
        %2177 = vmatprep.subr.mxu0 0.0
        %2178 = vmatpush2.msra.mxu0 0.0
        %2179 = vmatprep.subr.mxu0 0.0
        %2180 = vmatpush2.msra.mxu0 0.0
        %2181 = vmatprep.subr.mxu0 0.0
        %2182 = vmatpush2.msra.mxu0 0.0
        %2183 = vmatprep.subr.mxu0 0.0
        %2184 = vmatpush2.msra.mxu0 0.0
        %2185 = vmatprep.subr.mxu0 0.0
        %2186 = vmatpush2.msra.mxu0 0.0
        %2187 = vmatprep.subr.mxu0 0.0
        %2188 = vmatpush2.msra.mxu0 0.0
        %2189 = vmatprep.subr.mxu0 0.0
        %2190 = vmatpush2.msra.mxu0 0.0
        %2191 = vmatprep.mubr.f32.mxu0 0.0
        %2192 = vmatmul.mubr.f32.gmra.mxu0 %v2125
        %v2193 = vpop.f32.mrf.mxu0
        %v2194 = vadd.f32 %v2121, %v2193
        %v2195 = vpop.f32.mrf.mxu0
        %2196 = vdwg.mxu0
        %v2197 = vadd.f32 %v2194, %v607
        %v2198 = vmax.f32 %v2197, 0.0
        %v2200 = vsel %vm455, %v2198, 0
        %2202 = vmatprep.subr.mxu0 0.0
        %2203 = vmatpush1.msra.mxu0 0.0
        %2204 = vmatprep.subr.mxu0 0.0
        %2205 = vmatpush1.msra.mxu0 0.0
        %2206 = vmatprep.subr.mxu0 0.0
        %2207 = vmatpush1.msra.mxu0 0.0
        %2208 = vmatprep.subr.mxu0 0.0
        %2209 = vmatpush1.msra.mxu0 0.0
        %2210 = vmatprep.subr.mxu0 0.0
        %2211 = vmatpush1.msra.mxu0 0.0
        %2212 = vmatprep.subr.mxu0 0.0
        %2213 = vmatpush1.msra.mxu0 0.0
        %2214 = vmatprep.subr.mxu0 0.0
        %2215 = vmatpush1.msra.mxu0 0.0
        %2216 = vmatprep.subr.mxu0 0.0
        %2217 = vmatpush1.msra.mxu0 0.0
        %2218 = vmatprep.subr.mxu0 0.0
        %2219 = vmatpush1.msra.mxu0 0.0
        %2220 = vmatprep.subr.mxu0 0.0
        %2221 = vmatpush1.msra.mxu0 0.0
        %2222 = vmatprep.subr.mxu0 0.0
        %2223 = vmatpush1.msra.mxu0 0.0
        %2224 = vmatprep.subr.mxu0 0.0
        %2225 = vmatpush1.msra.mxu0 0.0
        %2226 = vmatprep.subr.mxu0 0.0
        %2227 = vmatpush1.msra.mxu0 %v451
        %2228 = vmatprep.subr.mxu0 0.0
        %2229 = vmatpush1.msra.mxu0 %v450
        %2230 = vmatprep.subr.mxu0 0.0
        %2231 = vmatpush1.msra.mxu0 %v449
        %2232 = vmatprep.subr.mxu0 0.0
        %2233 = vmatpush1.msra.mxu0 %v448
        %2234 = vmatprep.subr.mxu0 0.0
        %2235 = vmatpush2.msra.mxu0 0.0
        %2236 = vmatprep.subr.mxu0 0.0
        %2237 = vmatpush2.msra.mxu0 0.0
        %2238 = vmatprep.subr.mxu0 0.0
        %2239 = vmatpush2.msra.mxu0 0.0
        %2240 = vmatprep.subr.mxu0 0.0
        %2241 = vmatpush2.msra.mxu0 0.0
        %2242 = vmatprep.subr.mxu0 0.0
        %2243 = vmatpush2.msra.mxu0 0.0
        %2244 = vmatprep.subr.mxu0 0.0
        %2245 = vmatpush2.msra.mxu0 0.0
        %2246 = vmatprep.subr.mxu0 0.0
        %2247 = vmatpush2.msra.mxu0 0.0
        %2248 = vmatprep.subr.mxu0 0.0
        %2249 = vmatpush2.msra.mxu0 0.0
        %2250 = vmatprep.subr.mxu0 0.0
        %2251 = vmatpush2.msra.mxu0 0.0
        %2252 = vmatprep.subr.mxu0 0.0
        %2253 = vmatpush2.msra.mxu0 0.0
        %2254 = vmatprep.subr.mxu0 0.0
        %2255 = vmatpush2.msra.mxu0 0.0
        %2256 = vmatprep.subr.mxu0 0.0
        %2257 = vmatpush2.msra.mxu0 0.0
        %2258 = vmatprep.subr.mxu0 0.0
        %2259 = vmatpush2.msra.mxu0 0.0
        %2260 = vmatprep.subr.mxu0 0.0
        %2261 = vmatpush2.msra.mxu0 0.0
        %2262 = vmatprep.subr.mxu0 0.0
        %2263 = vmatpush2.msra.mxu0 0.0
        %2264 = vmatprep.subr.mxu0 0.0
        %2265 = vmatpush2.msra.mxu0 0.0
        %2266 = vmatprep.mubr.f32.mxu0 0.0
        %2267 = vmatmul.mubr.f32.gmra.mxu0 %v2200
        %v2268 = vpop.f32.mrf.mxu0
        %v2269 = vadd.f32 %v615, %v2268
        %v2270 = vpop.f32.mrf.mxu0
        %2271 = vdwg.mxu0
        %v2272 = vtanh.pop %v2269
        %2274 = vrot.lane.b32.xlu0 %v2269, 120
        %v2275 = vpop.permute.xlu0 %2274
        %2277 = vst.msk [vmem:[%s432] sm:$0xff] %vm455, %v2275
        %2279 = vrot.lane.b32.xlu0 %v916, 8
        %v2280 = vpop.permute.xlu0 %2279
        %2283 = vrot.lane.b32.xlu0 %v1142, 16
        %v2284 = vpop.permute.xlu0 %2283
        %2287 = vrot.lane.b32.xlu0 %v1368, 24
        %v2288 = vpop.permute.xlu0 %2287
        %2291 = vrot.lane.b32.xlu0 %v1594, 32
        %v2292 = vpop.permute.xlu0 %2291
        %2295 = vrot.lane.b32.xlu0 %v1820, 40
        %v2296 = vpop.permute.xlu0 %2295
        %2299 = vrot.lane.b32.xlu0 %v2046, 48
        %v2300 = vpop.permute.xlu0 %2299
        %2303 = vrot.lane.b32.xlu0 %v2272, 56
        %v2304 = vpop.permute.xlu0 %2303
        %vm2306 = vcmask 64512
        %v2307 = vsel %vm2306, %v690, %v2280
        %v2308 = vsel %vm529, %v2307, %v2284
        %vm2309 = vcmask 195584
        %v2310 = vsel %vm2309, %v2308, %v2288
        %v2311 = vsel %vm455, %v2310, %v2292
        %vm2312 = vcmask 326656
        %v2313 = vsel %vm2312, %v2311, %v2296
        %vm2314 = vcmask 392192
        %v2315 = vsel %vm2314, %v2313, %v2300
        %vm2316 = vcmask 457728
        %v2317 = vsel %vm2316, %v2315, %v2304
        %vm2318 = vcmask 523264
        %2319 = vst.msk [vmem:[%s425] sm:$0xff] %vm2318, %v2317
        %s2320 = sand.u32 %s214, 1
        %s2321 = scalar_lea.sflag [#allocation4], %s2320
        %s2322 = sand.u32 %s214, 1
        %s2323 = smul.addr %s2322, 8
        %s2324 = scalar_lea.vmem [#allocation11], %s2323
        %s2325 = sand.u32 %s240, 1
        %s2326 = scalar_lea.sflag [#allocation13], %s2325
        %s2327 = sand.u32 %s240, 1
        %s2328 = smul.addr %s2327, 8
        %s2329 = scalar_lea.vmem [#allocation12], %s2328
        // Predicated region
        $region73: #{tpu_custom_call.1} parent=47 // pred_check
          %p2330 = pneg %p224
        $region74: #{tpu_custom_call.1} parent=47 // pred_check_branch
          %2332 = sbr.rel (%p2330) target = $region76
        $region75: #{tpu_custom_call.1} parent=47 // pred_region
          %s2334 = ssub.s32 128, 128
          %2335 = vsyncadd %s2321, %s2334
          %s2336 = smul.addr %s38, 2
          %s2337 = sadd.s32 %s37, %s2336
          %s2338 = smul.addr %s2337, 128
          %s2339 = scalar_lea.hbm %s7, %s2338
          %s2341 = sshll.u32 %s2324, 4
          %s2342 = int_to_ptr.vmem [resolvable:$true] %s2341
          %2344 = dma.vmem_to_hbm [thread:$0]  %s2342, 128, %s2339, %s2321
        $region76: #{tpu_custom_call.1} parent=47 // pred_fallthru
          _
        // Predicated region
        $region77: #{tpu_custom_call.1} parent=47 // pred_check
          %p2345 = pneg %p250
        $region78: #{tpu_custom_call.1} parent=47 // pred_check_branch
          %2347 = sbr.rel (%p2345) target = $region80
        $region79: #{tpu_custom_call.1} parent=47 // pred_region
          %s2349 = ssub.s32 128, 128
          %2350 = vsyncadd %s2326, %s2349
          %s2351 = smul.addr %s37, 128
          %s2352 = scalar_lea.hbm %s8, %s2351
          %s2354 = sshll.u32 %s2329, 4
          %s2355 = int_to_ptr.vmem [resolvable:$true] %s2354
          %2357 = dma.vmem_to_hbm [thread:$0]  %s2355, 128, %s2352, %s2326
        $region80: #{tpu_custom_call.1} parent=47 // pred_fallthru
          _
      $region48: #{tpu_custom_call.1} parent=5 // pred_fallthru
        _
      %p2358 = scmp.le.s32.totalorder 2, %s28
      // Predicated region
      $region81: #{tpu_custom_call.1} parent=5 // pred_check
        %p2359 = pneg %p2358
      $region82: #{tpu_custom_call.1} parent=5 // pred_check_branch
        %2361 = sbr.rel (%p2359) target = $region84
      $region83: #{tpu_custom_call.1} parent=5 // pred_region
        %s2362 = ssub.s32 %s28, 2
        // Predicated region
        $region85: #{tpu_custom_call.1} parent=83 // pred_check
          %p2363 = pneg %p230
        $region86: #{tpu_custom_call.1} parent=83 // pred_check_branch
          %2365 = sbr.rel (%p2363) target = $region88
        $region87: #{tpu_custom_call.1} parent=83 // pred_region
          %s2366 = sand.u32 %s215, 1
          %s2367 = scalar_lea.sflag [#allocation4], %s2366
          %s2368 = sand.u32 %s215, 1
          %s2369 = smul.addr %s2368, 8
          %s2370 = scalar_lea.vmem [#allocation11], %s2369
          %2371 = dma.done %s2367, 128
        $region88: #{tpu_custom_call.1} parent=83 // pred_fallthru
          _
        // Predicated region
        $region89: #{tpu_custom_call.1} parent=83 // pred_check
          %p2372 = pneg %p256
        $region90: #{tpu_custom_call.1} parent=83 // pred_check_branch
          %2374 = sbr.rel (%p2372) target = $region92
        $region91: #{tpu_custom_call.1} parent=83 // pred_region
          %s2375 = sand.u32 %s241, 1
          %s2376 = scalar_lea.sflag [#allocation13], %s2375
          %s2377 = sand.u32 %s241, 1
          %s2378 = smul.addr %s2377, 8
          %s2379 = scalar_lea.vmem [#allocation12], %s2378
          %2380 = dma.done %s2376, 128
        $region92: #{tpu_custom_call.1} parent=83 // pred_fallthru
          _
      $region84: #{tpu_custom_call.1} parent=5 // pred_fallthru
        _
    $region6: #{tpu_custom_call.1} parent=1 // loop_footer
      %s32 = sadd.s32 1, %s28
    $region7: #{tpu_custom_call.1} parent=1 // loop_footer_branch
      %27 = sbr.rel target = $region3
    $region8: #{tpu_custom_call.1} parent=1 // loop_exit
      _
    %2381 = vsyncpa [#allocation3], 1
    %s2382 = scalar_lea.sflag [#allocation3], 1
    %2383 = vsyncpa %s2382, 1
    %2384 = vsyncpa [#allocation6], 1
    %s2385 = scalar_lea.sflag [#allocation6], 1
    %2386 = vsyncpa %s2385, 1
    %2387 = vsyncpa [#allocation9], 1
    %2388 = vsyncpa [#allocation4], 1
    %s2389 = scalar_lea.sflag [#allocation4], 1
    %2390 = vsyncpa %s2389, 1
    %2391 = vsyncpa [#allocation13], 1
    %s2392 = scalar_lea.sflag [#allocation13], 1
    %2393 = vsyncpa %s2392, 1

</llo_original>
